<compile_context>
chip_gen: v7x
topology: tpu7x:2x2x1
jax: 0.10.0
libtpu: 0.0.40
codegen_flags: <defaults>
</compile_context>

<pallas_src>
import jax
import jax.numpy as jnp
from jax.experimental import pallas as pl
from jax.experimental.pallas import tpu as pltpu


def _time_lstm_kernel(x_ref, tsm1_ref, w_ref, b_ref, wd_ref, bd_ref,
                      out_ref, h_scr, c_scr):
    # Grid: (batch_tiles, seq_chunks); seq is the inner, sequential axis.
    @pl.when(pl.program_id(1) == 0)
    def _():
        h_scr[...] = jnp.zeros_like(h_scr)
        c_scr[...] = jnp.zeros_like(c_scr)

    T = out_ref.shape[0]
    H = h_scr.shape[1]

    w = w_ref[...]      # (H + D, 4H)  stacked [W_all^T; U_all^T]
    b = b_ref[...]      # (1, 4H)      W_all_b + U_all_b
    wd = wd_ref[...]    # (H, H)       W_d^T
    bd = bd_ref[...]    # (1, H)

    h = h_scr[...]      # (TB, H)
    c = c_scr[...]      # (TB, H)

    # Statically unrolled recurrence over the T timesteps of this chunk.
    for t in range(T):
        x = x_ref[t]          # (TB, D)
        tsm1 = tsm1_ref[t]    # (TB, 1)  == timestamps[:, s] - 1

        # c_s1 = tanh(W_d(c));  c_adj = (c - c_s1) + c_s1 * ts == c + c_s1*(ts-1)
        c_s1 = jnp.tanh(jnp.dot(c, wd, preferred_element_type=jnp.float32) + bd)
        c_adj = c + c_s1 * tsm1

        # outs = W_all(h) + U_all(x)  fused into one matmul; sigmoid over full 4H.
        hx = jnp.concatenate([h, x], axis=1)                          # (TB, H + D)
        gates = jax.nn.sigmoid(
            jnp.dot(hx, w, preferred_element_type=jnp.float32) + b)   # (TB, 4H)

        f = gates[:, 0 * H:1 * H]
        i = gates[:, 1 * H:2 * H]
        o = gates[:, 2 * H:3 * H]
        c_tmp = gates[:, 3 * H:4 * H]   # NB: sigmoid candidate, as in the reference

        c = f * c_adj + i * c_tmp
        h = o * jnp.tanh(c)
        out_ref[t] = h

    h_scr[...] = h
    c_scr[...] = c


def time_lstm_forward(inputs, timestamps, params, reverse=False,
                      seq_chunk=8, batch_tile=None):
    """Pallas TimeLSTM forward. inputs: (B, S, D), timestamps: (B, S)."""
    B, S, D = inputs.shape
    H = params["W_d_w"].shape[0]
    assert D == H, "TimeLSTM forward only consistent when input_size == hidden_size"

    f32 = jnp.float32
    T = max(1, min(seq_chunk, S))
    S_pad = -(-S // T) * T                  # round seq up to a multiple of T
    B_pad = -(-B // 8) * 8                  # pad batch to sublane multiple
    TB = B_pad if batch_tile is None else batch_tile
    assert B_pad % TB == 0 and TB % 8 == 0

    # Glue: seq-major, zero-padded inputs.
    x_seq = jnp.transpose(inputs, (1, 0, 2)).astype(f32)              # (S, B, D)
    x_seq = jnp.pad(x_seq, ((0, S_pad - S), (0, B_pad - B), (0, 0)))
    # (ts - 1) as (S_pad, B_pad, 1); broadcast over H happens inside the kernel.
    ts_m1 = jnp.transpose(timestamps, (1, 0)).astype(f32) - 1.0       # (S, B)
    ts_m1 = jnp.pad(ts_m1, ((0, S_pad - S), (0, B_pad - B)))[:, :, None]

    # Fused gate weights: outs = [h, x] @ [W_all^T; U_all^T] + (b_all + b_u).
    w_stacked = jnp.concatenate(
        [jnp.transpose(params["W_all_w"]), jnp.transpose(params["U_all_w"])],
        axis=0).astype(f32)                                           # (H + D, 4H)
    b_comb = (params["W_all_b"] + params["U_all_b"]).reshape(1, 4 * H).astype(f32)
    wd_T = jnp.transpose(params["W_d_w"]).astype(f32)                 # (H, H)
    b_d = params["W_d_b"].reshape(1, H).astype(f32)

    grid = (B_pad // TB, S_pad // T)

    out = pl.pallas_call(
        _time_lstm_kernel,
        out_shape=jax.ShapeDtypeStruct((S_pad, B_pad, H), f32),
        grid_spec=pltpu.PrefetchScalarGridSpec(
            num_scalar_prefetch=0,
            grid=grid,
            in_specs=[
                pl.BlockSpec((T, TB, D), lambda bt, sc: (sc, bt, 0)),      # x chunk
                pl.BlockSpec((T, TB, 1), lambda bt, sc: (sc, bt, 0)),      # (ts-1) chunk
                pl.BlockSpec((H + D, 4 * H), lambda bt, sc: (0, 0)),       # stacked gate W
                pl.BlockSpec((1, 4 * H), lambda bt, sc: (0, 0)),           # combined gate b
                pl.BlockSpec((H, H), lambda bt, sc: (0, 0)),               # W_d^T
                pl.BlockSpec((1, H), lambda bt, sc: (0, 0)),               # b_d
            ],
            out_specs=pl.BlockSpec((T, TB, H), lambda bt, sc: (sc, bt, 0)),
            scratch_shapes=[pltpu.VMEM((TB, H), f32),    # h state
                            pltpu.VMEM((TB, H), f32)],   # c state
        ),
        compiler_params=pltpu.CompilerParams(
            # Batch tiles are independent (megacore-shardable on v7x); the seq
            # chunk axis is the sequential recurrence.
            dimension_semantics=("parallel", "arbitrary")),
    )(x_seq, ts_m1, w_stacked, b_comb, wd_T, b_d)

    out = jnp.transpose(out, (1, 0, 2))[:B, :S]                       # (B, S, H)
    if reverse:
        # PyTorch reverse=True only reverses the output list (states are still
        # computed in forward order), i.e. a flip along the seq axis.
        out = jnp.flip(out, axis=1)
    return out


def time_lstm_reference(inputs, timestamps, params):
    """Pure-JAX reference mirroring the PyTorch loop, for validation."""
    B, S, D = inputs.shape
    H = params["W_d_w"].shape[0]
    h = jnp.zeros((B, H), jnp.float32)
    c = jnp.zeros((B, H), jnp.float32)
    outs_list = []
    for s in range(S):
        c_s1 = jnp.tanh(c @ params["W_d_w"].T + params["W_d_b"])
        c_s2 = c_s1 * timestamps[:, s:s + 1]
        c_adj = (c - c_s1) + c_s2
        outs = (h @ params["W_all_w"].T + params["W_all_b"]
                + inputs[:, s] @ params["U_all_w"].T + params["U_all_b"])
        f, i, o, c_tmp = jnp.split(outs, 4, axis=1)
        f, i, o, c_tmp = map(jax.nn.sigmoid, (f, i, o, c_tmp))
        c = f * c_adj + i * c_tmp
        h = o * jnp.tanh(c)
        outs_list.append(h)
    return jnp.stack(outs_list, axis=1)


def init_params(key, input_size, hidden_size):
    """Deterministic init, PyTorch nn.Linear style (uniform +/- 1/sqrt(fan_in))."""
    ks = jax.random.split(key, 6)
    def lin(kw, kb, fan_in, fan_out):
        bound = 1.0 / jnp.sqrt(fan_in)
        w = jax.random.uniform(kw, (fan_out, fan_in), jnp.float32, -bound, bound)
        b = jax.random.uniform(kb, (fan_out,), jnp.float32, -bound, bound)
        return w, b
    W_all_w, W_all_b = lin(ks[0], ks[1], input_size, 4 * hidden_size)
    U_all_w, U_all_b = lin(ks[2], ks[3], hidden_size, 4 * hidden_size)
    W_d_w, W_d_b = lin(ks[4], ks[5], hidden_size, hidden_size)
    return dict(W_all_w=W_all_w, W_all_b=W_all_b,
                U_all_w=U_all_w, U_all_b=U_all_b,
                W_d_w=W_d_w, W_d_b=W_d_b)


if __name__ == "__main__":
    B, S, D = 4, 20, 32          # batch, seq, feature (input_size == hidden_size)
    H = D                        # S=20 with seq_chunk=8 exercises chunking + padding

    key = jax.random.PRNGKey(0)
    k_x, k_t, k_p = jax.random.split(key, 3)
    inputs = jax.random.normal(k_x, (B, S, D), jnp.float32)
    timestamps = jax.random.uniform(k_t, (B, S), jnp.float32, 0.0, 2.0)
    params = init_params(k_p, D, H)

    out = time_lstm_forward(inputs, timestamps, params, seq_chunk=8)
    out = jax.block_until_ready(out)

    ref = time_lstm_reference(inputs, timestamps, params)
    assert out.shape == (B, S, H)
    assert jnp.allclose(out, ref, atol=1e-4, rtol=1e-4), "mismatch vs reference"

    print("KERNEL_OK")
</pallas_src>

<mosaic_0001>
module attributes {stable_mosaic.version = 11 : i64} {
  func.func @_time_lstm_kernel(%arg0: i32, %arg1: i32, %arg2: memref<8x8x32xf32, #tpu.memory_space<vmem>>, %arg3: memref<8x8x1xf32, #tpu.memory_space<vmem>>, %arg4: memref<64x128xf32, #tpu.memory_space<vmem>>, %arg5: memref<1x128xf32, #tpu.memory_space<vmem>>, %arg6: memref<32x32xf32, #tpu.memory_space<vmem>>, %arg7: memref<1x32xf32, #tpu.memory_space<vmem>>, %arg8: memref<8x8x32xf32, #tpu.memory_space<vmem>>, %arg9: memref<8x32xf32, #tpu.memory_space<vmem>>, %arg10: memref<8x32xf32, #tpu.memory_space<vmem>>) attributes {dimension_semantics = [#tpu.dimension_semantics<parallel>, #tpu.dimension_semantics<arbitrary>], iteration_bounds = array<i64: 1, 3>, scalar_prefetch = 0 : i64, scratch_operands = 2 : i64, tpu.core_type = #tpu.core_type<tc>, window_params = [{transform_indices = @transform_0, window_bounds = array<i64: 8, 8, 32>}, {transform_indices = @transform_1, window_bounds = array<i64: 8, 8, 1>}, {pipeline_mode = #tpu.pipeline_mode<synchronous>, transform_indices = @transform_2, window_bounds = array<i64: 64, 128>}, {pipeline_mode = #tpu.pipeline_mode<synchronous>, transform_indices = @transform_3, window_bounds = array<i64: 1, 128>}, {pipeline_mode = #tpu.pipeline_mode<synchronous>, transform_indices = @transform_4, window_bounds = array<i64: 32, 32>}, {pipeline_mode = #tpu.pipeline_mode<synchronous>, transform_indices = @transform_5, window_bounds = array<i64: 1, 32>}, {transform_indices = @transform_6, window_bounds = array<i64: 8, 8, 32>}]} {
    %c0_i32 = arith.constant 0 : i32
    %0 = arith.cmpi eq, %arg1, %c0_i32 : i32
    %1 = arith.extui %0 : i1 to i32
    %c0_i32_0 = arith.constant 0 : i32
    %2 = arith.cmpi ne, %1, %c0_i32_0 : i32
    scf.if %2 {
      %cst_104 = arith.constant 0.000000e+00 : f32
      %267 = vector.broadcast %cst_104 : f32 to vector<8x32xf32>
      %c0_105 = arith.constant 0 : index
      %c0_106 = arith.constant 0 : index
      %268 = vector.load %arg9[%c0_105, %c0_106] : memref<8x32xf32, #tpu.memory_space<vmem>>, vector<8x32xf32>
      tpu.vector_store %arg9[%c0_105, %c0_106], %267 {strides = array<i32>} : memref<8x32xf32, #tpu.memory_space<vmem>>, vector<8x32xf32>,
      %cst_107 = arith.constant 0.000000e+00 : f32
      %269 = vector.broadcast %cst_107 : f32 to vector<8x32xf32>
      %c0_108 = arith.constant 0 : index
      %c0_109 = arith.constant 0 : index
      %270 = vector.load %arg10[%c0_108, %c0_109] : memref<8x32xf32, #tpu.memory_space<vmem>>, vector<8x32xf32>
      tpu.vector_store %arg10[%c0_108, %c0_109], %269 {strides = array<i32>} : memref<8x32xf32, #tpu.memory_space<vmem>>, vector<8x32xf32>,
    } else {
    }
    %c0 = arith.constant 0 : index
    %c0_1 = arith.constant 0 : index
    %3 = vector.load %arg4[%c0, %c0_1] : memref<64x128xf32, #tpu.memory_space<vmem>>, vector<64x128xf32>
    %c0_2 = arith.constant 0 : index
    %c0_3 = arith.constant 0 : index
    %4 = vector.load %arg5[%c0_2, %c0_3] : memref<1x128xf32, #tpu.memory_space<vmem>>, vector<1x128xf32>
    %c0_4 = arith.constant 0 : index
    %c0_5 = arith.constant 0 : index
    %5 = vector.load %arg6[%c0_4, %c0_5] : memref<32x32xf32, #tpu.memory_space<vmem>>, vector<32x32xf32>
    %c0_6 = arith.constant 0 : index
    %c0_7 = arith.constant 0 : index
    %6 = vector.load %arg7[%c0_6, %c0_7] : memref<1x32xf32, #tpu.memory_space<vmem>>, vector<1x32xf32>
    %c0_8 = arith.constant 0 : index
    %c0_9 = arith.constant 0 : index
    %7 = vector.load %arg9[%c0_8, %c0_9] : memref<8x32xf32, #tpu.memory_space<vmem>>, vector<8x32xf32>
    %c0_10 = arith.constant 0 : index
    %c0_11 = arith.constant 0 : index
    %8 = vector.load %arg10[%c0_10, %c0_11] : memref<8x32xf32, #tpu.memory_space<vmem>>, vector<8x32xf32>
    %c0_12 = arith.constant 0 : index
    %c0_13 = arith.constant 0 : index
    %c0_14 = arith.constant 0 : index
    %9 = vector.load %arg2[%c0_12, %c0_13, %c0_14] : memref<8x8x32xf32, #tpu.memory_space<vmem>>, vector<1x8x32xf32>
    %10 = vector.shape_cast %9 : vector<1x8x32xf32> to vector<8x32xf32>
    %c0_15 = arith.constant 0 : index
    %c0_16 = arith.constant 0 : index
    %c0_17 = arith.constant 0 : index
    %11 = vector.load %arg3[%c0_15, %c0_16, %c0_17] : memref<8x8x1xf32, #tpu.memory_space<vmem>>, vector<1x8x1xf32>
    %12 = vector.shape_cast %11 : vector<1x8x1xf32> to vector<8x1xf32>
    %cst = arith.constant dense<0.000000e+00> : vector<8x32xf32>
    %13 = tpu.matmul %8, %5, %cst {dimension_numbers = #tpu.dot_dimension_numbers<[1], [0], [0], [1], [0, 0, 1, 1], [], []>} : vector<8x32xf32>, vector<32x32xf32>, vector<8x32xf32> -> vector<8x32xf32>
    %14 = vector.broadcast %6 : vector<1x32xf32> to vector<8x32xf32>
    %15 = arith.addf %13, %14 : vector<8x32xf32>
    %16 = math.tanh %15 : vector<8x32xf32>
    %17 = vector.broadcast %12 : vector<8x1xf32> to vector<8x32xf32>
    %18 = arith.mulf %16, %17 : vector<8x32xf32>
    %19 = arith.addf %8, %18 : vector<8x32xf32>
    %20 = tpu.concatenate %7, %10 in 1 : vector<8x32xf32>, vector<8x32xf32> -> vector<8x64xf32>
    %cst_18 = arith.constant dense<0.000000e+00> : vector<8x128xf32>
    %21 = tpu.matmul %20, %3, %cst_18 {dimension_numbers = #tpu.dot_dimension_numbers<[1], [0], [0], [1], [0, 0, 1, 1], [], []>} : vector<8x64xf32>, vector<64x128xf32>, vector<8x128xf32> -> vector<8x128xf32>
    %22 = vector.broadcast %4 : vector<1x128xf32> to vector<8x128xf32>
    %23 = arith.addf %21, %22 : vector<8x128xf32>
    %24 = arith.negf %23 : vector<8x128xf32>
    %25 = math.exp %24 : vector<8x128xf32>
    %cst_19 = arith.constant 1.000000e+00 : f32
    %26 = vector.broadcast %cst_19 : f32 to vector<8x128xf32>
    %27 = arith.addf %26, %25 : vector<8x128xf32>
    %28 = arith.divf %26, %27 : vector<8x128xf32>
    %29 = vector.extract_strided_slice %28 {offsets = [0, 0], sizes = [8, 32], strides = [1, 1]} : vector<8x128xf32> to vector<8x32xf32>
    %30 = vector.extract_strided_slice %28 {offsets = [0, 32], sizes = [8, 32], strides = [1, 1]} : vector<8x128xf32> to vector<8x32xf32>
    %31 = vector.extract_strided_slice %28 {offsets = [0, 64], sizes = [8, 32], strides = [1, 1]} : vector<8x128xf32> to vector<8x32xf32>
    %32 = vector.extract_strided_slice %28 {offsets = [0, 96], sizes = [8, 32], strides = [1, 1]} : vector<8x128xf32> to vector<8x32xf32>
    %33 = arith.mulf %29, %19 : vector<8x32xf32>
    %34 = arith.mulf %30, %32 : vector<8x32xf32>
    %35 = arith.addf %33, %34 : vector<8x32xf32>
    %36 = math.tanh %35 : vector<8x32xf32>
    %37 = arith.mulf %31, %36 : vector<8x32xf32>
    %c0_20 = arith.constant 0 : index
    %c0_21 = arith.constant 0 : index
    %c0_22 = arith.constant 0 : index
    %38 = vector.load %arg8[%c0_20, %c0_21, %c0_22] : memref<8x8x32xf32, #tpu.memory_space<vmem>>, vector<1x8x32xf32>
    %39 = vector.shape_cast %38 : vector<1x8x32xf32> to vector<8x32xf32>
    %40 = vector.shape_cast %37 : vector<8x32xf32> to vector<1x8x32xf32>
    tpu.vector_store %arg8[%c0_20, %c0_21, %c0_22], %40 {strides = array<i32>} : memref<8x8x32xf32, #tpu.memory_space<vmem>>, vector<1x8x32xf32>,
    %c1 = arith.constant 1 : index
    %c0_23 = arith.constant 0 : index
    %c0_24 = arith.constant 0 : index
    %41 = vector.load %arg2[%c1, %c0_23, %c0_24] : memref<8x8x32xf32, #tpu.memory_space<vmem>>, vector<1x8x32xf32>
    %42 = vector.shape_cast %41 : vector<1x8x32xf32> to vector<8x32xf32>
    %c1_25 = arith.constant 1 : index
    %c0_26 = arith.constant 0 : index
    %c0_27 = arith.constant 0 : index
    %43 = vector.load %arg3[%c1_25, %c0_26, %c0_27] : memref<8x8x1xf32, #tpu.memory_space<vmem>>, vector<1x8x1xf32>
    %44 = vector.shape_cast %43 : vector<1x8x1xf32> to vector<8x1xf32>
    %cst_28 = arith.constant dense<0.000000e+00> : vector<8x32xf32>
    %45 = tpu.matmul %35, %5, %cst_28 {dimension_numbers = #tpu.dot_dimension_numbers<[1], [0], [0], [1], [0, 0, 1, 1], [], []>} : vector<8x32xf32>, vector<32x32xf32>, vector<8x32xf32> -> vector<8x32xf32>
    %46 = vector.broadcast %6 : vector<1x32xf32> to vector<8x32xf32>
    %47 = arith.addf %45, %46 : vector<8x32xf32>
    %48 = math.tanh %47 : vector<8x32xf32>
    %49 = vector.broadcast %44 : vector<8x1xf32> to vector<8x32xf32>
    %50 = arith.mulf %48, %49 : vector<8x32xf32>
    %51 = arith.addf %35, %50 : vector<8x32xf32>
    %52 = tpu.concatenate %37, %42 in 1 : vector<8x32xf32>, vector<8x32xf32> -> vector<8x64xf32>
    %cst_29 = arith.constant dense<0.000000e+00> : vector<8x128xf32>
    %53 = tpu.matmul %52, %3, %cst_29 {dimension_numbers = #tpu.dot_dimension_numbers<[1], [0], [0], [1], [0, 0, 1, 1], [], []>} : vector<8x64xf32>, vector<64x128xf32>, vector<8x128xf32> -> vector<8x128xf32>
    %54 = vector.broadcast %4 : vector<1x128xf32> to vector<8x128xf32>
    %55 = arith.addf %53, %54 : vector<8x128xf32>
    %56 = arith.negf %55 : vector<8x128xf32>
    %57 = math.exp %56 : vector<8x128xf32>
    %cst_30 = arith.constant 1.000000e+00 : f32
    %58 = vector.broadcast %cst_30 : f32 to vector<8x128xf32>
    %59 = arith.addf %58, %57 : vector<8x128xf32>
    %60 = arith.divf %58, %59 : vector<8x128xf32>
    %61 = vector.extract_strided_slice %60 {offsets = [0, 0], sizes = [8, 32], strides = [1, 1]} : vector<8x128xf32> to vector<8x32xf32>
    %62 = vector.extract_strided_slice %60 {offsets = [0, 32], sizes = [8, 32], strides = [1, 1]} : vector<8x128xf32> to vector<8x32xf32>
    %63 = vector.extract_strided_slice %60 {offsets = [0, 64], sizes = [8, 32], strides = [1, 1]} : vector<8x128xf32> to vector<8x32xf32>
    %64 = vector.extract_strided_slice %60 {offsets = [0, 96], sizes = [8, 32], strides = [1, 1]} : vector<8x128xf32> to vector<8x32xf32>
    %65 = arith.mulf %61, %51 : vector<8x32xf32>
    %66 = arith.mulf %62, %64 : vector<8x32xf32>
    %67 = arith.addf %65, %66 : vector<8x32xf32>
    %68 = math.tanh %67 : vector<8x32xf32>
    %69 = arith.mulf %63, %68 : vector<8x32xf32>
    %c1_31 = arith.constant 1 : index
    %c0_32 = arith.constant 0 : index
    %c0_33 = arith.constant 0 : index
    %70 = vector.load %arg8[%c1_31, %c0_32, %c0_33] : memref<8x8x32xf32, #tpu.memory_space<vmem>>, vector<1x8x32xf32>
    %71 = vector.shape_cast %70 : vector<1x8x32xf32> to vector<8x32xf32>
    %72 = vector.shape_cast %69 : vector<8x32xf32> to vector<1x8x32xf32>
    tpu.vector_store %arg8[%c1_31, %c0_32, %c0_33], %72 {strides = array<i32>} : memref<8x8x32xf32, #tpu.memory_space<vmem>>, vector<1x8x32xf32>,
    %c2 = arith.constant 2 : index
    %c0_34 = arith.constant 0 : index
    %c0_35 = arith.constant 0 : index
    %73 = vector.load %arg2[%c2, %c0_34, %c0_35] : memref<8x8x32xf32, #tpu.memory_space<vmem>>, vector<1x8x32xf32>
    %74 = vector.shape_cast %73 : vector<1x8x32xf32> to vector<8x32xf32>
    %c2_36 = arith.constant 2 : index
    %c0_37 = arith.constant 0 : index
    %c0_38 = arith.constant 0 : index
    %75 = vector.load %arg3[%c2_36, %c0_37, %c0_38] : memref<8x8x1xf32, #tpu.memory_space<vmem>>, vector<1x8x1xf32>
    %76 = vector.shape_cast %75 : vector<1x8x1xf32> to vector<8x1xf32>
    %cst_39 = arith.constant dense<0.000000e+00> : vector<8x32xf32>
    %77 = tpu.matmul %67, %5, %cst_39 {dimension_numbers = #tpu.dot_dimension_numbers<[1], [0], [0], [1], [0, 0, 1, 1], [], []>} : vector<8x32xf32>, vector<32x32xf32>, vector<8x32xf32> -> vector<8x32xf32>
    %78 = vector.broadcast %6 : vector<1x32xf32> to vector<8x32xf32>
    %79 = arith.addf %77, %78 : vector<8x32xf32>
    %80 = math.tanh %79 : vector<8x32xf32>
    %81 = vector.broadcast %76 : vector<8x1xf32> to vector<8x32xf32>
    %82 = arith.mulf %80, %81 : vector<8x32xf32>
    %83 = arith.addf %67, %82 : vector<8x32xf32>
    %84 = tpu.concatenate %69, %74 in 1 : vector<8x32xf32>, vector<8x32xf32> -> vector<8x64xf32>
    %cst_40 = arith.constant dense<0.000000e+00> : vector<8x128xf32>
    %85 = tpu.matmul %84, %3, %cst_40 {dimension_numbers = #tpu.dot_dimension_numbers<[1], [0], [0], [1], [0, 0, 1, 1], [], []>} : vector<8x64xf32>, vector<64x128xf32>, vector<8x128xf32> -> vector<8x128xf32>
    %86 = vector.broadcast %4 : vector<1x128xf32> to vector<8x128xf32>
    %87 = arith.addf %85, %86 : vector<8x128xf32>
    %88 = arith.negf %87 : vector<8x128xf32>
    %89 = math.exp %88 : vector<8x128xf32>
    %cst_41 = arith.constant 1.000000e+00 : f32
    %90 = vector.broadcast %cst_41 : f32 to vector<8x128xf32>
    %91 = arith.addf %90, %89 : vector<8x128xf32>
    %92 = arith.divf %90, %91 : vector<8x128xf32>
    %93 = vector.extract_strided_slice %92 {offsets = [0, 0], sizes = [8, 32], strides = [1, 1]} : vector<8x128xf32> to vector<8x32xf32>
    %94 = vector.extract_strided_slice %92 {offsets = [0, 32], sizes = [8, 32], strides = [1, 1]} : vector<8x128xf32> to vector<8x32xf32>
    %95 = vector.extract_strided_slice %92 {offsets = [0, 64], sizes = [8, 32], strides = [1, 1]} : vector<8x128xf32> to vector<8x32xf32>
    %96 = vector.extract_strided_slice %92 {offsets = [0, 96], sizes = [8, 32], strides = [1, 1]} : vector<8x128xf32> to vector<8x32xf32>
    %97 = arith.mulf %93, %83 : vector<8x32xf32>
    %98 = arith.mulf %94, %96 : vector<8x32xf32>
    %99 = arith.addf %97, %98 : vector<8x32xf32>
    %100 = math.tanh %99 : vector<8x32xf32>
    %101 = arith.mulf %95, %100 : vector<8x32xf32>
    %c2_42 = arith.constant 2 : index
    %c0_43 = arith.constant 0 : index
    %c0_44 = arith.constant 0 : index
    %102 = vector.load %arg8[%c2_42, %c0_43, %c0_44] : memref<8x8x32xf32, #tpu.memory_space<vmem>>, vector<1x8x32xf32>
    %103 = vector.shape_cast %102 : vector<1x8x32xf32> to vector<8x32xf32>
    %104 = vector.shape_cast %101 : vector<8x32xf32> to vector<1x8x32xf32>
    tpu.vector_store %arg8[%c2_42, %c0_43, %c0_44], %104 {strides = array<i32>} : memref<8x8x32xf32, #tpu.memory_space<vmem>>, vector<1x8x32xf32>,
    %c3 = arith.constant 3 : index
    %c0_45 = arith.constant 0 : index
    %c0_46 = arith.constant 0 : index
    %105 = vector.load %arg2[%c3, %c0_45, %c0_46] : memref<8x8x32xf32, #tpu.memory_space<vmem>>, vector<1x8x32xf32>
    %106 = vector.shape_cast %105 : vector<1x8x32xf32> to vector<8x32xf32>
    %c3_47 = arith.constant 3 : index
    %c0_48 = arith.constant 0 : index
    %c0_49 = arith.constant 0 : index
    %107 = vector.load %arg3[%c3_47, %c0_48, %c0_49] : memref<8x8x1xf32, #tpu.memory_space<vmem>>, vector<1x8x1xf32>
    %108 = vector.shape_cast %107 : vector<1x8x1xf32> to vector<8x1xf32>
    %cst_50 = arith.constant dense<0.000000e+00> : vector<8x32xf32>
    %109 = tpu.matmul %99, %5, %cst_50 {dimension_numbers = #tpu.dot_dimension_numbers<[1], [0], [0], [1], [0, 0, 1, 1], [], []>} : vector<8x32xf32>, vector<32x32xf32>, vector<8x32xf32> -> vector<8x32xf32>
    %110 = vector.broadcast %6 : vector<1x32xf32> to vector<8x32xf32>
    %111 = arith.addf %109, %110 : vector<8x32xf32>
    %112 = math.tanh %111 : vector<8x32xf32>
    %113 = vector.broadcast %108 : vector<8x1xf32> to vector<8x32xf32>
    %114 = arith.mulf %112, %113 : vector<8x32xf32>
    %115 = arith.addf %99, %114 : vector<8x32xf32>
    %116 = tpu.concatenate %101, %106 in 1 : vector<8x32xf32>, vector<8x32xf32> -> vector<8x64xf32>
    %cst_51 = arith.constant dense<0.000000e+00> : vector<8x128xf32>
    %117 = tpu.matmul %116, %3, %cst_51 {dimension_numbers = #tpu.dot_dimension_numbers<[1], [0], [0], [1], [0, 0, 1, 1], [], []>} : vector<8x64xf32>, vector<64x128xf32>, vector<8x128xf32> -> vector<8x128xf32>
    %118 = vector.broadcast %4 : vector<1x128xf32> to vector<8x128xf32>
    %119 = arith.addf %117, %118 : vector<8x128xf32>
    %120 = arith.negf %119 : vector<8x128xf32>
    %121 = math.exp %120 : vector<8x128xf32>
    %cst_52 = arith.constant 1.000000e+00 : f32
    %122 = vector.broadcast %cst_52 : f32 to vector<8x128xf32>
    %123 = arith.addf %122, %121 : vector<8x128xf32>
    %124 = arith.divf %122, %123 : vector<8x128xf32>
    %125 = vector.extract_strided_slice %124 {offsets = [0, 0], sizes = [8, 32], strides = [1, 1]} : vector<8x128xf32> to vector<8x32xf32>
    %126 = vector.extract_strided_slice %124 {offsets = [0, 32], sizes = [8, 32], strides = [1, 1]} : vector<8x128xf32> to vector<8x32xf32>
    %127 = vector.extract_strided_slice %124 {offsets = [0, 64], sizes = [8, 32], strides = [1, 1]} : vector<8x128xf32> to vector<8x32xf32>
    %128 = vector.extract_strided_slice %124 {offsets = [0, 96], sizes = [8, 32], strides = [1, 1]} : vector<8x128xf32> to vector<8x32xf32>
    %129 = arith.mulf %125, %115 : vector<8x32xf32>
    %130 = arith.mulf %126, %128 : vector<8x32xf32>
    %131 = arith.addf %129, %130 : vector<8x32xf32>
    %132 = math.tanh %131 : vector<8x32xf32>
    %133 = arith.mulf %127, %132 : vector<8x32xf32>
    %c3_53 = arith.constant 3 : index
    %c0_54 = arith.constant 0 : index
    %c0_55 = arith.constant 0 : index
    %134 = vector.load %arg8[%c3_53, %c0_54, %c0_55] : memref<8x8x32xf32, #tpu.memory_space<vmem>>, vector<1x8x32xf32>
    %135 = vector.shape_cast %134 : vector<1x8x32xf32> to vector<8x32xf32>
    %136 = vector.shape_cast %133 : vector<8x32xf32> to vector<1x8x32xf32>
    tpu.vector_store %arg8[%c3_53, %c0_54, %c0_55], %136 {strides = array<i32>} : memref<8x8x32xf32, #tpu.memory_space<vmem>>, vector<1x8x32xf32>,
    %c4 = arith.constant 4 : index
    %c0_56 = arith.constant 0 : index
    %c0_57 = arith.constant 0 : index
    %137 = vector.load %arg2[%c4, %c0_56, %c0_57] : memref<8x8x32xf32, #tpu.memory_space<vmem>>, vector<1x8x32xf32>
    %138 = vector.shape_cast %137 : vector<1x8x32xf32> to vector<8x32xf32>
    %c4_58 = arith.constant 4 : index
    %c0_59 = arith.constant 0 : index
    %c0_60 = arith.constant 0 : index
    %139 = vector.load %arg3[%c4_58, %c0_59, %c0_60] : memref<8x8x1xf32, #tpu.memory_space<vmem>>, vector<1x8x1xf32>
    %140 = vector.shape_cast %139 : vector<1x8x1xf32> to vector<8x1xf32>
    %cst_61 = arith.constant dense<0.000000e+00> : vector<8x32xf32>
    %141 = tpu.matmul %131, %5, %cst_61 {dimension_numbers = #tpu.dot_dimension_numbers<[1], [0], [0], [1], [0, 0, 1, 1], [], []>} : vector<8x32xf32>, vector<32x32xf32>, vector<8x32xf32> -> vector<8x32xf32>
    %142 = vector.broadcast %6 : vector<1x32xf32> to vector<8x32xf32>
    %143 = arith.addf %141, %142 : vector<8x32xf32>
    %144 = math.tanh %143 : vector<8x32xf32>
    %145 = vector.broadcast %140 : vector<8x1xf32> to vector<8x32xf32>
    %146 = arith.mulf %144, %145 : vector<8x32xf32>
    %147 = arith.addf %131, %146 : vector<8x32xf32>
    %148 = tpu.concatenate %133, %138 in 1 : vector<8x32xf32>, vector<8x32xf32> -> vector<8x64xf32>
    %cst_62 = arith.constant dense<0.000000e+00> : vector<8x128xf32>
    %149 = tpu.matmul %148, %3, %cst_62 {dimension_numbers = #tpu.dot_dimension_numbers<[1], [0], [0], [1], [0, 0, 1, 1], [], []>} : vector<8x64xf32>, vector<64x128xf32>, vector<8x128xf32> -> vector<8x128xf32>
    %150 = vector.broadcast %4 : vector<1x128xf32> to vector<8x128xf32>
    %151 = arith.addf %149, %150 : vector<8x128xf32>
    %152 = arith.negf %151 : vector<8x128xf32>
    %153 = math.exp %152 : vector<8x128xf32>
    %cst_63 = arith.constant 1.000000e+00 : f32
    %154 = vector.broadcast %cst_63 : f32 to vector<8x128xf32>
    %155 = arith.addf %154, %153 : vector<8x128xf32>
    %156 = arith.divf %154, %155 : vector<8x128xf32>
    %157 = vector.extract_strided_slice %156 {offsets = [0, 0], sizes = [8, 32], strides = [1, 1]} : vector<8x128xf32> to vector<8x32xf32>
    %158 = vector.extract_strided_slice %156 {offsets = [0, 32], sizes = [8, 32], strides = [1, 1]} : vector<8x128xf32> to vector<8x32xf32>
    %159 = vector.extract_strided_slice %156 {offsets = [0, 64], sizes = [8, 32], strides = [1, 1]} : vector<8x128xf32> to vector<8x32xf32>
    %160 = vector.extract_strided_slice %156 {offsets = [0, 96], sizes = [8, 32], strides = [1, 1]} : vector<8x128xf32> to vector<8x32xf32>
    %161 = arith.mulf %157, %147 : vector<8x32xf32>
    %162 = arith.mulf %158, %160 : vector<8x32xf32>
    %163 = arith.addf %161, %162 : vector<8x32xf32>
    %164 = math.tanh %163 : vector<8x32xf32>
    %165 = arith.mulf %159, %164 : vector<8x32xf32>
    %c4_64 = arith.constant 4 : index
    %c0_65 = arith.constant 0 : index
    %c0_66 = arith.constant 0 : index
    %166 = vector.load %arg8[%c4_64, %c0_65, %c0_66] : memref<8x8x32xf32, #tpu.memory_space<vmem>>, vector<1x8x32xf32>
    %167 = vector.shape_cast %166 : vector<1x8x32xf32> to vector<8x32xf32>
    %168 = vector.shape_cast %165 : vector<8x32xf32> to vector<1x8x32xf32>
    tpu.vector_store %arg8[%c4_64, %c0_65, %c0_66], %168 {strides = array<i32>} : memref<8x8x32xf32, #tpu.memory_space<vmem>>, vector<1x8x32xf32>,
    %c5 = arith.constant 5 : index
    %c0_67 = arith.constant 0 : index
    %c0_68 = arith.constant 0 : index
    %169 = vector.load %arg2[%c5, %c0_67, %c0_68] : memref<8x8x32xf32, #tpu.memory_space<vmem>>, vector<1x8x32xf32>
    %170 = vector.shape_cast %169 : vector<1x8x32xf32> to vector<8x32xf32>
    %c5_69 = arith.constant 5 : index
    %c0_70 = arith.constant 0 : index
    %c0_71 = arith.constant 0 : index
    %171 = vector.load %arg3[%c5_69, %c0_70, %c0_71] : memref<8x8x1xf32, #tpu.memory_space<vmem>>, vector<1x8x1xf32>
    %172 = vector.shape_cast %171 : vector<1x8x1xf32> to vector<8x1xf32>
    %cst_72 = arith.constant dense<0.000000e+00> : vector<8x32xf32>
    %173 = tpu.matmul %163, %5, %cst_72 {dimension_numbers = #tpu.dot_dimension_numbers<[1], [0], [0], [1], [0, 0, 1, 1], [], []>} : vector<8x32xf32>, vector<32x32xf32>, vector<8x32xf32> -> vector<8x32xf32>
    %174 = vector.broadcast %6 : vector<1x32xf32> to vector<8x32xf32>
    %175 = arith.addf %173, %174 : vector<8x32xf32>
    %176 = math.tanh %175 : vector<8x32xf32>
    %177 = vector.broadcast %172 : vector<8x1xf32> to vector<8x32xf32>
    %178 = arith.mulf %176, %177 : vector<8x32xf32>
    %179 = arith.addf %163, %178 : vector<8x32xf32>
    %180 = tpu.concatenate %165, %170 in 1 : vector<8x32xf32>, vector<8x32xf32> -> vector<8x64xf32>
    %cst_73 = arith.constant dense<0.000000e+00> : vector<8x128xf32>
    %181 = tpu.matmul %180, %3, %cst_73 {dimension_numbers = #tpu.dot_dimension_numbers<[1], [0], [0], [1], [0, 0, 1, 1], [], []>} : vector<8x64xf32>, vector<64x128xf32>, vector<8x128xf32> -> vector<8x128xf32>
    %182 = vector.broadcast %4 : vector<1x128xf32> to vector<8x128xf32>
    %183 = arith.addf %181, %182 : vector<8x128xf32>
    %184 = arith.negf %183 : vector<8x128xf32>
    %185 = math.exp %184 : vector<8x128xf32>
    %cst_74 = arith.constant 1.000000e+00 : f32
    %186 = vector.broadcast %cst_74 : f32 to vector<8x128xf32>
    %187 = arith.addf %186, %185 : vector<8x128xf32>
    %188 = arith.divf %186, %187 : vector<8x128xf32>
    %189 = vector.extract_strided_slice %188 {offsets = [0, 0], sizes = [8, 32], strides = [1, 1]} : vector<8x128xf32> to vector<8x32xf32>
    %190 = vector.extract_strided_slice %188 {offsets = [0, 32], sizes = [8, 32], strides = [1, 1]} : vector<8x128xf32> to vector<8x32xf32>
    %191 = vector.extract_strided_slice %188 {offsets = [0, 64], sizes = [8, 32], strides = [1, 1]} : vector<8x128xf32> to vector<8x32xf32>
    %192 = vector.extract_strided_slice %188 {offsets = [0, 96], sizes = [8, 32], strides = [1, 1]} : vector<8x128xf32> to vector<8x32xf32>
    %193 = arith.mulf %189, %179 : vector<8x32xf32>
    %194 = arith.mulf %190, %192 : vector<8x32xf32>
    %195 = arith.addf %193, %194 : vector<8x32xf32>
    %196 = math.tanh %195 : vector<8x32xf32>
    %197 = arith.mulf %191, %196 : vector<8x32xf32>
    %c5_75 = arith.constant 5 : index
    %c0_76 = arith.constant 0 : index
    %c0_77 = arith.constant 0 : index
    %198 = vector.load %arg8[%c5_75, %c0_76, %c0_77] : memref<8x8x32xf32, #tpu.memory_space<vmem>>, vector<1x8x32xf32>
    %199 = vector.shape_cast %198 : vector<1x8x32xf32> to vector<8x32xf32>
    %200 = vector.shape_cast %197 : vector<8x32xf32> to vector<1x8x32xf32>
    tpu.vector_store %arg8[%c5_75, %c0_76, %c0_77], %200 {strides = array<i32>} : memref<8x8x32xf32, #tpu.memory_space<vmem>>, vector<1x8x32xf32>,
    %c6 = arith.constant 6 : index
    %c0_78 = arith.constant 0 : index
    %c0_79 = arith.constant 0 : index
    %201 = vector.load %arg2[%c6, %c0_78, %c0_79] : memref<8x8x32xf32, #tpu.memory_space<vmem>>, vector<1x8x32xf32>
    %202 = vector.shape_cast %201 : vector<1x8x32xf32> to vector<8x32xf32>
    %c6_80 = arith.constant 6 : index
    %c0_81 = arith.constant 0 : index
    %c0_82 = arith.constant 0 : index
    %203 = vector.load %arg3[%c6_80, %c0_81, %c0_82] : memref<8x8x1xf32, #tpu.memory_space<vmem>>, vector<1x8x1xf32>
    %204 = vector.shape_cast %203 : vector<1x8x1xf32> to vector<8x1xf32>
    %cst_83 = arith.constant dense<0.000000e+00> : vector<8x32xf32>
    %205 = tpu.matmul %195, %5, %cst_83 {dimension_numbers = #tpu.dot_dimension_numbers<[1], [0], [0], [1], [0, 0, 1, 1], [], []>} : vector<8x32xf32>, vector<32x32xf32>, vector<8x32xf32> -> vector<8x32xf32>
    %206 = vector.broadcast %6 : vector<1x32xf32> to vector<8x32xf32>
    %207 = arith.addf %205, %206 : vector<8x32xf32>
    %208 = math.tanh %207 : vector<8x32xf32>
    %209 = vector.broadcast %204 : vector<8x1xf32> to vector<8x32xf32>
    %210 = arith.mulf %208, %209 : vector<8x32xf32>
    %211 = arith.addf %195, %210 : vector<8x32xf32>
    %212 = tpu.concatenate %197, %202 in 1 : vector<8x32xf32>, vector<8x32xf32> -> vector<8x64xf32>
    %cst_84 = arith.constant dense<0.000000e+00> : vector<8x128xf32>
    %213 = tpu.matmul %212, %3, %cst_84 {dimension_numbers = #tpu.dot_dimension_numbers<[1], [0], [0], [1], [0, 0, 1, 1], [], []>} : vector<8x64xf32>, vector<64x128xf32>, vector<8x128xf32> -> vector<8x128xf32>
    %214 = vector.broadcast %4 : vector<1x128xf32> to vector<8x128xf32>
    %215 = arith.addf %213, %214 : vector<8x128xf32>
    %216 = arith.negf %215 : vector<8x128xf32>
    %217 = math.exp %216 : vector<8x128xf32>
    %cst_85 = arith.constant 1.000000e+00 : f32
    %218 = vector.broadcast %cst_85 : f32 to vector<8x128xf32>
    %219 = arith.addf %218, %217 : vector<8x128xf32>
    %220 = arith.divf %218, %219 : vector<8x128xf32>
    %221 = vector.extract_strided_slice %220 {offsets = [0, 0], sizes = [8, 32], strides = [1, 1]} : vector<8x128xf32> to vector<8x32xf32>
    %222 = vector.extract_strided_slice %220 {offsets = [0, 32], sizes = [8, 32], strides = [1, 1]} : vector<8x128xf32> to vector<8x32xf32>
    %223 = vector.extract_strided_slice %220 {offsets = [0, 64], sizes = [8, 32], strides = [1, 1]} : vector<8x128xf32> to vector<8x32xf32>
    %224 = vector.extract_strided_slice %220 {offsets = [0, 96], sizes = [8, 32], strides = [1, 1]} : vector<8x128xf32> to vector<8x32xf32>
    %225 = arith.mulf %221, %211 : vector<8x32xf32>
    %226 = arith.mulf %222, %224 : vector<8x32xf32>
    %227 = arith.addf %225, %226 : vector<8x32xf32>
    %228 = math.tanh %227 : vector<8x32xf32>
    %229 = arith.mulf %223, %228 : vector<8x32xf32>
    %c6_86 = arith.constant 6 : index
    %c0_87 = arith.constant 0 : index
    %c0_88 = arith.constant 0 : index
    %230 = vector.load %arg8[%c6_86, %c0_87, %c0_88] : memref<8x8x32xf32, #tpu.memory_space<vmem>>, vector<1x8x32xf32>
    %231 = vector.shape_cast %230 : vector<1x8x32xf32> to vector<8x32xf32>
    %232 = vector.shape_cast %229 : vector<8x32xf32> to vector<1x8x32xf32>
    tpu.vector_store %arg8[%c6_86, %c0_87, %c0_88], %232 {strides = array<i32>} : memref<8x8x32xf32, #tpu.memory_space<vmem>>, vector<1x8x32xf32>,
    %c7 = arith.constant 7 : index
    %c0_89 = arith.constant 0 : index
    %c0_90 = arith.constant 0 : index
    %233 = vector.load %arg2[%c7, %c0_89, %c0_90] : memref<8x8x32xf32, #tpu.memory_space<vmem>>, vector<1x8x32xf32>
    %234 = vector.shape_cast %233 : vector<1x8x32xf32> to vector<8x32xf32>
    %c7_91 = arith.constant 7 : index
    %c0_92 = arith.constant 0 : index
    %c0_93 = arith.constant 0 : index
    %235 = vector.load %arg3[%c7_91, %c0_92, %c0_93] : memref<8x8x1xf32, #tpu.memory_space<vmem>>, vector<1x8x1xf32>
    %236 = vector.shape_cast %235 : vector<1x8x1xf32> to vector<8x1xf32>
    %cst_94 = arith.constant dense<0.000000e+00> : vector<8x32xf32>
    %237 = tpu.matmul %227, %5, %cst_94 {dimension_numbers = #tpu.dot_dimension_numbers<[1], [0], [0], [1], [0, 0, 1, 1], [], []>} : vector<8x32xf32>, vector<32x32xf32>, vector<8x32xf32> -> vector<8x32xf32>
    %238 = vector.broadcast %6 : vector<1x32xf32> to vector<8x32xf32>
    %239 = arith.addf %237, %238 : vector<8x32xf32>
    %240 = math.tanh %239 : vector<8x32xf32>
    %241 = vector.broadcast %236 : vector<8x1xf32> to vector<8x32xf32>
    %242 = arith.mulf %240, %241 : vector<8x32xf32>
    %243 = arith.addf %227, %242 : vector<8x32xf32>
    %244 = tpu.concatenate %229, %234 in 1 : vector<8x32xf32>, vector<8x32xf32> -> vector<8x64xf32>
    %cst_95 = arith.constant dense<0.000000e+00> : vector<8x128xf32>
    %245 = tpu.matmul %244, %3, %cst_95 {dimension_numbers = #tpu.dot_dimension_numbers<[1], [0], [0], [1], [0, 0, 1, 1], [], []>} : vector<8x64xf32>, vector<64x128xf32>, vector<8x128xf32> -> vector<8x128xf32>
    %246 = vector.broadcast %4 : vector<1x128xf32> to vector<8x128xf32>
    %247 = arith.addf %245, %246 : vector<8x128xf32>
    %248 = arith.negf %247 : vector<8x128xf32>
    %249 = math.exp %248 : vector<8x128xf32>
    %cst_96 = arith.constant 1.000000e+00 : f32
    %250 = vector.broadcast %cst_96 : f32 to vector<8x128xf32>
    %251 = arith.addf %250, %249 : vector<8x128xf32>
    %252 = arith.divf %250, %251 : vector<8x128xf32>
    %253 = vector.extract_strided_slice %252 {offsets = [0, 0], sizes = [8, 32], strides = [1, 1]} : vector<8x128xf32> to vector<8x32xf32>
    %254 = vector.extract_strided_slice %252 {offsets = [0, 32], sizes = [8, 32], strides = [1, 1]} : vector<8x128xf32> to vector<8x32xf32>
    %255 = vector.extract_strided_slice %252 {offsets = [0, 64], sizes = [8, 32], strides = [1, 1]} : vector<8x128xf32> to vector<8x32xf32>
    %256 = vector.extract_strided_slice %252 {offsets = [0, 96], sizes = [8, 32], strides = [1, 1]} : vector<8x128xf32> to vector<8x32xf32>
    %257 = arith.mulf %253, %243 : vector<8x32xf32>
    %258 = arith.mulf %254, %256 : vector<8x32xf32>
    %259 = arith.addf %257, %258 : vector<8x32xf32>
    %260 = math.tanh %259 : vector<8x32xf32>
    %261 = arith.mulf %255, %260 : vector<8x32xf32>
    %c7_97 = arith.constant 7 : index
    %c0_98 = arith.constant 0 : index
    %c0_99 = arith.constant 0 : index
    %262 = vector.load %arg8[%c7_97, %c0_98, %c0_99] : memref<8x8x32xf32, #tpu.memory_space<vmem>>, vector<1x8x32xf32>
    %263 = vector.shape_cast %262 : vector<1x8x32xf32> to vector<8x32xf32>
    %264 = vector.shape_cast %261 : vector<8x32xf32> to vector<1x8x32xf32>
    tpu.vector_store %arg8[%c7_97, %c0_98, %c0_99], %264 {strides = array<i32>} : memref<8x8x32xf32, #tpu.memory_space<vmem>>, vector<1x8x32xf32>,
    %c0_100 = arith.constant 0 : index
    %c0_101 = arith.constant 0 : index
    %265 = vector.load %arg9[%c0_100, %c0_101] : memref<8x32xf32, #tpu.memory_space<vmem>>, vector<8x32xf32>
    tpu.vector_store %arg9[%c0_100, %c0_101], %261 {strides = array<i32>} : memref<8x32xf32, #tpu.memory_space<vmem>>, vector<8x32xf32>,
    %c0_102 = arith.constant 0 : index
    %c0_103 = arith.constant 0 : index
    %266 = vector.load %arg10[%c0_102, %c0_103] : memref<8x32xf32, #tpu.memory_space<vmem>>, vector<8x32xf32>
    tpu.vector_store %arg10[%c0_102, %c0_103], %259 {strides = array<i32>} : memref<8x32xf32, #tpu.memory_space<vmem>>, vector<8x32xf32>,
    return
  }
  func.func @transform_0(%arg0: i32, %arg1: i32) -> (i32, i32, i32) {
    %c0_i32 = arith.constant 0 : i32
    %c0_i32_0 = arith.constant 0 : i32
    return %arg1, %arg0, %c0_i32 : i32, i32, i32
  }
  func.func @transform_1(%arg0: i32, %arg1: i32) -> (i32, i32, i32) {
    %c0_i32 = arith.constant 0 : i32
    %c0_i32_0 = arith.constant 0 : i32
    return %arg1, %arg0, %c0_i32 : i32, i32, i32
  }
  func.func @transform_2(%arg0: i32, %arg1: i32) -> (i32, i32) {
    %c0_i32 = arith.constant 0 : i32
    %c0_i32_0 = arith.constant 0 : i32
    %c0_i32_1 = arith.constant 0 : i32
    return %c0_i32, %c0_i32_0 : i32, i32
  }
  func.func @transform_3(%arg0: i32, %arg1: i32) -> (i32, i32) {
    %c0_i32 = arith.constant 0 : i32
    %c0_i32_0 = arith.constant 0 : i32
    %c0_i32_1 = arith.constant 0 : i32
    return %c0_i32, %c0_i32_0 : i32, i32
  }
  func.func @transform_4(%arg0: i32, %arg1: i32) -> (i32, i32) {
    %c0_i32 = arith.constant 0 : i32
    %c0_i32_0 = arith.constant 0 : i32
    %c0_i32_1 = arith.constant 0 : i32
    return %c0_i32, %c0_i32_0 : i32, i32
  }
  func.func @transform_5(%arg0: i32, %arg1: i32) -> (i32, i32) {
    %c0_i32 = arith.constant 0 : i32
    %c0_i32_0 = arith.constant 0 : i32
    %c0_i32_1 = arith.constant 0 : i32
    return %c0_i32, %c0_i32_0 : i32, i32
  }
  func.func @transform_6(%arg0: i32, %arg1: i32) -> (i32, i32, i32) {
    %c0_i32 = arith.constant 0 : i32
    %c0_i32_0 = arith.constant 0 : i32
    return %arg1, %arg0, %c0_i32 : i32, i32, i32
  }
}

</mosaic_0001>

<llo_original>
// kernel: tpu_custom_call.1
$region0: #{tpu_custom_call.1}
  #allocation0 [shape = 'u32[]', space=smem, size = 0x4, offset = 0x4, fixed_abs, tag = 'smem constant byte address 0x4 - core index']
  #allocation1 [shape = 'u32[144,128]{1,0:T(1,128)}', space=vmem, size = 0x12000, scoped, tag = 'internal scratch']
  #allocation2 [shape = 'f32[8,32]{1,0:T(8,128)}', space=vmem, size = 0x1000, scoped, tag = 'scratch operand']
  #allocation3 [shape = 'f32[8,32]{1,0:T(8,128)}', space=vmem, size = 0x1000, scoped, tag = 'scratch operand']
  %s0 = inlined_call_operand.vmem [shape: f32[24,8,32], index: 0, kind: input, shape index: {}]
  %s1 = inlined_call_operand.vmem [shape: f32[24,8,1], index: 1, kind: input, shape index: {}]
  %s2 = inlined_call_operand.hbm [shape: f32[64,128], index: 2, kind: input, shape index: {}]
  %s3 = inlined_call_operand.vmem [shape: f32[1,128], index: 3, kind: input, shape index: {}]
  %s4 = inlined_call_operand.hbm [shape: f32[32,32], index: 4, kind: input, shape index: {}]
  %s5 = inlined_call_operand.vmem [shape: f32[1,32], index: 5, kind: input, shape index: {}]
  %s6 = inlined_call_operand.hbm [shape: f32[24,8,32], index: 6, kind: output, shape index: {}]
  %s7 = sld [smem:[#allocation0]]
  $region69: #{tpu_custom_call.1} parent=0
    _
  %s9 = ssub.s32 1, %s7
  %s10 = scalar_select 0, %s9, %s7
  $region1: #{tpu_custom_call.1} parent=0
    #allocation4 [shape = 'u8[32768]{0}', space=vmem, size = 0x8000, scoped, tag = 'input window, operand 2, single buffered']
    #allocation5 [shape = 's32[2]{0}', space=sflag, size = 0x8, scoped, tag = 'scoped memory for tpu_custom_call.1']
    #allocation6 [shape = 's32[2]{0}', space=sflag, size = 0x8, scoped, tag = 'scoped memory for tpu_custom_call.1']
    #allocation7 [shape = 'u8[16384]{0}', space=vmem, size = 0x4000, scoped, tag = 'input window, operand 4, single buffered']
    #allocation8 [shape = 's32[1]{0}', space=sflag, size = 0x4, scoped, tag = 'scoped memory for tpu_custom_call.1']
    #allocation9 [shape = 'u8[65536]{0}', space=vmem, size = 0x10000, scoped, tag = 'output window, operand 0']
    %11 = vsyncpa [#allocation5], 0
    %12 = vsyncpa [#allocation8], 0
    %13 = vsyncpa [#allocation6], 0
    %s14 = scalar_lea.sflag [#allocation6], 1
    %15 = vsyncpa %s14, 0
    loop: start=0, step=1, limit=5
    $region2: #{tpu_custom_call.1} parent=1 // loop_pre_header
      _
    $region3: #{tpu_custom_call.1} parent=1 // loop_header
      %s17 = sphi 0, %s21
      %p18 = scmp.ge.s32.totalorder %s17, 5
      %s24 = sphi 0, %s36
      %s25 = sphi 0, %s32
      %s26 = sphi 0, %s24
      %s27 = sphi 0, %s25
      %s28 = sphi 0, %s26
      %s29 = sphi 0, %s27
      %s41 = sphi 0, %s43
      %s44 = sphi 0, %s41
      %s45 = sphi 0, %s44
      %s61 = sphi 0, %s45
      %s69 = sphi 0, %s71
      %s72 = sphi 0, %s69
      %s73 = sphi 0, %s72
      %s89 = sphi 0, %s73
      %s93 = sphi 0, %s93
      %s95 = sphi 0, %s93
      %s96 = sphi 0, %s95
      %s110 = sphi 0, %s96
      %s114 = sphi 0, %s114
      %s116 = sphi 0, %s114
      %s117 = sphi 0, %s116
      %s131 = sphi 0, %s117
      %s135 = sphi 0, %s135
      %s137 = sphi 0, %s135
      %s138 = sphi 0, %s137
      %s152 = sphi 0, %s138
      %s156 = sphi 0, %s156
      %s158 = sphi 0, %s156
      %s159 = sphi 0, %s158
      %s173 = sphi 0, %s159
      %s181 = sphi 0, %s183
      %s184 = sphi 0, %s181
      %s185 = sphi 0, %s184
      %s201 = sphi 0, %s185
    $region4: #{tpu_custom_call.1} parent=1 // loop_header_branch
      %20 = sbr.rel (%p18) target = $region8
    $region5: #{tpu_custom_call.1} parent=1 // loop_body
      %s22 = ssub.s32 %s17, 1
      %s23 = ssub.s32 %s17, 2
      %s30 = sadd.s32 1, %s25
      %p31 = scmp.ge.s32.totalorder %s30, 3
      %s32 = scalar_select %p31, 0, %s30
      %s33 = sadd.s32 1, %s24
      %s34 = scalar_select %p31, %s33, %s24
      %p35 = scmp.ge.s32.totalorder %s34, 1
      %s36 = scalar_select %p35, 0, %s34
      %s37 = ssub.s32 %s25, %s32
      %s38 = ssub.s32 %s24, %s36
      %s39 = sor.u32 %s37, %s38
      %p40 = scmp.eq.s32.totalorder %s39, 0
      %s42 = sadd.s32 %s41, 1
      %s43 = scalar_select %p40, %s41, %s42
      %p46 = pneg %p40
      %p47 = scmp.eq.s32.totalorder %s17, 2
      %p48 = por %p46, %p47
      %p49 = scmp.ne.s32.totalorder %s41, %s44
      %p50 = scmp.eq.s32.totalorder %s17, 0
      %p51 = por %p49, %p50
      %p52 = scmp.ne.s32.totalorder %s41, %s44
      %p53 = scmp.eq.s32.totalorder %s22, 2
      %p54 = por %p52, %p53
      %p55 = scmp.ne.s32.totalorder %s44, %s45
      %p56 = scmp.eq.s32.totalorder %s22, 0
      %p57 = por %p55, %p56
      %p58 = scmp.ne.s32.totalorder %s44, %s45
      %p59 = scmp.eq.s32.totalorder %s23, 2
      %p60 = por %p58, %p59
      %p62 = scmp.ne.s32.totalorder %s45, %s61
      %p63 = scmp.eq.s32.totalorder %s23, 0
      %p64 = por %p62, %p63
      %s65 = ssub.s32 %s25, %s32
      %s66 = ssub.s32 %s24, %s36
      %s67 = sor.u32 %s65, %s66
      %p68 = scmp.eq.s32.totalorder %s67, 0
      %s70 = sadd.s32 %s69, 1
      %s71 = scalar_select %p68, %s69, %s70
      %p74 = pneg %p68
      %p75 = scmp.eq.s32.totalorder %s17, 2
      %p76 = por %p74, %p75
      %p77 = scmp.ne.s32.totalorder %s69, %s72
      %p78 = scmp.eq.s32.totalorder %s17, 0
      %p79 = por %p77, %p78
      %p80 = scmp.ne.s32.totalorder %s69, %s72
      %p81 = scmp.eq.s32.totalorder %s22, 2
      %p82 = por %p80, %p81
      %p83 = scmp.ne.s32.totalorder %s72, %s73
      %p84 = scmp.eq.s32.totalorder %s22, 0
      %p85 = por %p83, %p84
      %p86 = scmp.ne.s32.totalorder %s72, %s73
      %p87 = scmp.eq.s32.totalorder %s23, 2
      %p88 = por %p86, %p87
      %p90 = scmp.ne.s32.totalorder %s73, %s89
      %p91 = scmp.eq.s32.totalorder %s23, 0
      %p92 = por %p90, %p91
      %s94 = sadd.s32 %s93, 1
      %p97 = scmp.eq.s32.totalorder %s17, 2
      %p98 = scmp.ne.s32.totalorder %s93, %s95
      %p99 = scmp.eq.s32.totalorder %s17, 0
      %p100 = por %p98, %p99
      %p101 = scmp.ne.s32.totalorder %s93, %s95
      %p102 = scmp.eq.s32.totalorder %s22, 2
      %p103 = por %p101, %p102
      %p104 = scmp.ne.s32.totalorder %s95, %s96
      %p105 = scmp.eq.s32.totalorder %s22, 0
      %p106 = por %p104, %p105
      %p107 = scmp.ne.s32.totalorder %s95, %s96
      %p108 = scmp.eq.s32.totalorder %s23, 2
      %p109 = por %p107, %p108
      %p111 = scmp.ne.s32.totalorder %s96, %s110
      %p112 = scmp.eq.s32.totalorder %s23, 0
      %p113 = por %p111, %p112
      %s115 = sadd.s32 %s114, 1
      %p118 = scmp.eq.s32.totalorder %s17, 2
      %p119 = scmp.ne.s32.totalorder %s114, %s116
      %p120 = scmp.eq.s32.totalorder %s17, 0
      %p121 = por %p119, %p120
      %p122 = scmp.ne.s32.totalorder %s114, %s116
      %p123 = scmp.eq.s32.totalorder %s22, 2
      %p124 = por %p122, %p123
      %p125 = scmp.ne.s32.totalorder %s116, %s117
      %p126 = scmp.eq.s32.totalorder %s22, 0
      %p127 = por %p125, %p126
      %p128 = scmp.ne.s32.totalorder %s116, %s117
      %p129 = scmp.eq.s32.totalorder %s23, 2
      %p130 = por %p128, %p129
      %p132 = scmp.ne.s32.totalorder %s117, %s131
      %p133 = scmp.eq.s32.totalorder %s23, 0
      %p134 = por %p132, %p133
      %s136 = sadd.s32 %s135, 1
      %p139 = scmp.eq.s32.totalorder %s17, 2
      %p140 = scmp.ne.s32.totalorder %s135, %s137
      %p141 = scmp.eq.s32.totalorder %s17, 0
      %p142 = por %p140, %p141
      %p143 = scmp.ne.s32.totalorder %s135, %s137
      %p144 = scmp.eq.s32.totalorder %s22, 2
      %p145 = por %p143, %p144
      %p146 = scmp.ne.s32.totalorder %s137, %s138
      %p147 = scmp.eq.s32.totalorder %s22, 0
      %p148 = por %p146, %p147
      %p149 = scmp.ne.s32.totalorder %s137, %s138
      %p150 = scmp.eq.s32.totalorder %s23, 2
      %p151 = por %p149, %p150
      %p153 = scmp.ne.s32.totalorder %s138, %s152
      %p154 = scmp.eq.s32.totalorder %s23, 0
      %p155 = por %p153, %p154
      %s157 = sadd.s32 %s156, 1
      %p160 = scmp.eq.s32.totalorder %s17, 2
      %p161 = scmp.ne.s32.totalorder %s156, %s158
      %p162 = scmp.eq.s32.totalorder %s17, 0
      %p163 = por %p161, %p162
      %p164 = scmp.ne.s32.totalorder %s156, %s158
      %p165 = scmp.eq.s32.totalorder %s22, 2
      %p166 = por %p164, %p165
      %p167 = scmp.ne.s32.totalorder %s158, %s159
      %p168 = scmp.eq.s32.totalorder %s22, 0
      %p169 = por %p167, %p168
      %p170 = scmp.ne.s32.totalorder %s158, %s159
      %p171 = scmp.eq.s32.totalorder %s23, 2
      %p172 = por %p170, %p171
      %p174 = scmp.ne.s32.totalorder %s159, %s173
      %p175 = scmp.eq.s32.totalorder %s23, 0
      %p176 = por %p174, %p175
      %s177 = ssub.s32 %s25, %s32
      %s178 = ssub.s32 %s24, %s36
      %s179 = sor.u32 %s177, %s178
      %p180 = scmp.eq.s32.totalorder %s179, 0
      %s182 = sadd.s32 %s181, 1
      %s183 = scalar_select %p180, %s181, %s182
      %p186 = pneg %p180
      %p187 = scmp.eq.s32.totalorder %s17, 2
      %p188 = por %p186, %p187
      %p189 = scmp.ne.s32.totalorder %s181, %s184
      %p190 = scmp.eq.s32.totalorder %s17, 0
      %p191 = por %p189, %p190
      %p192 = scmp.ne.s32.totalorder %s181, %s184
      %p193 = scmp.eq.s32.totalorder %s22, 2
      %p194 = por %p192, %p193
      %p195 = scmp.ne.s32.totalorder %s184, %s185
      %p196 = scmp.eq.s32.totalorder %s22, 0
      %p197 = por %p195, %p196
      %p198 = scmp.ne.s32.totalorder %s184, %s185
      %p199 = scmp.eq.s32.totalorder %s23, 2
      %p200 = por %p198, %p199
      %p202 = scmp.ne.s32.totalorder %s185, %s201
      %p203 = scmp.eq.s32.totalorder %s23, 0
      %p204 = por %p202, %p203
      %p205 = scmp.le.s32.totalorder 1, %s17
      %p206 = scmp.lt.s32.totalorder %s17, 4
      %p207 = pnand %p205, %p206
      %p208 = pneg %p207
      // Predicated region
      $region9: #{tpu_custom_call.1} parent=5 // pred_check
        _
      $region10: #{tpu_custom_call.1} parent=5 // pred_check_branch
        %210 = sbr.rel (%p207) target = $region12
      $region11: #{tpu_custom_call.1} parent=5 // pred_region
        %s211 = ssub.s32 %s17, 1
        // Predicated region
        $region13: #{tpu_custom_call.1} parent=11 // pred_check
          %p212 = pneg %p106
        $region14: #{tpu_custom_call.1} parent=11 // pred_check_branch
          %214 = sbr.rel (%p212) target = $region16
        $region15: #{tpu_custom_call.1} parent=11 // pred_region
          %s216 = ssub.s32 1024, 1024
          %217 = vsyncadd [#allocation5], %s216
          %s218 = sshll.u32 [#allocation4], 4
          %s219 = int_to_ptr.vmem [resolvable:$true] %s218
          %224 = dma.hbm_to_vmem [thread:$0]  %s2, 1024, %s219, [#allocation5], 128, 128, 8
        $region16: #{tpu_custom_call.1} parent=11 // pred_fallthru
          _
        // Predicated region
        $region17: #{tpu_custom_call.1} parent=11 // pred_check
          %p225 = pneg %p127
        $region18: #{tpu_custom_call.1} parent=11 // pred_check_branch
          %227 = sbr.rel (%p225) target = $region20
        $region19: #{tpu_custom_call.1} parent=11 // pred_region
          _
        $region20: #{tpu_custom_call.1} parent=11 // pred_fallthru
          _
        // Predicated region
        $region21: #{tpu_custom_call.1} parent=11 // pred_check
          %p228 = pneg %p148
        $region22: #{tpu_custom_call.1} parent=11 // pred_check_branch
          %230 = sbr.rel (%p228) target = $region24
        $region23: #{tpu_custom_call.1} parent=11 // pred_region
          %s232 = ssub.s32 512, 512
          %233 = vsyncadd [#allocation8], %s232
          %s234 = sshll.u32 [#allocation7], 4
          %s235 = int_to_ptr.vmem [resolvable:$true] %s234
          %240 = dma.hbm_to_vmem [thread:$0]  %s4, 512, %s235, [#allocation8], 128, 128, 8
        $region24: #{tpu_custom_call.1} parent=11 // pred_fallthru
          _
        // Predicated region
        $region25: #{tpu_custom_call.1} parent=11 // pred_check
          %p241 = pneg %p169
        $region26: #{tpu_custom_call.1} parent=11 // pred_check_branch
          %243 = sbr.rel (%p241) target = $region28
        $region27: #{tpu_custom_call.1} parent=11 // pred_region
          _
        $region28: #{tpu_custom_call.1} parent=11 // pred_fallthru
          _
      $region12: #{tpu_custom_call.1} parent=5 // pred_fallthru
        _
      %p244 = scmp.lt.s32.totalorder %s17, 3
      // Predicated region
      $region29: #{tpu_custom_call.1} parent=5 // pred_check
        %p245 = pneg %p244
      $region30: #{tpu_custom_call.1} parent=5 // pred_check_branch
        %247 = sbr.rel (%p245) target = $region32
      $region31: #{tpu_custom_call.1} parent=5 // pred_region
        // Predicated region
        $region33: #{tpu_custom_call.1} parent=31 // pred_check
          %p248 = pneg %p51
        $region34: #{tpu_custom_call.1} parent=31 // pred_check_branch
          %250 = sbr.rel (%p248) target = $region36
        $region35: #{tpu_custom_call.1} parent=31 // pred_region
          %s251 = smul.u32 8, %s25
          %p252 = scmp.lt.s32.totalorder %s251, 23
          %s253 = scalar_select %p252, %s251, 23
          %p254 = scmp.lt.s32.totalorder %s24, 0
          %s255 = scalar_select %p254, %s24, 0
          %s256 = sadd.s32 %s255, %s253
          %s257 = smul.addr %s256, 8
          %s258 = scalar_lea.vmem %s0, %s257
          %s259 = smul.u32 8, %s25
        $region36: #{tpu_custom_call.1} parent=31 // pred_fallthru
          _
        // Predicated region
        $region37: #{tpu_custom_call.1} parent=31 // pred_check
          %p260 = pneg %p79
        $region38: #{tpu_custom_call.1} parent=31 // pred_check_branch
          %262 = sbr.rel (%p260) target = $region40
        $region39: #{tpu_custom_call.1} parent=31 // pred_region
          %s263 = smul.u32 8, %s25
          %p264 = scmp.lt.s32.totalorder %s263, 23
          %s265 = scalar_select %p264, %s263, 23
          %p266 = scmp.lt.s32.totalorder %s24, 0
          %s267 = scalar_select %p266, %s24, 0
          %s268 = sadd.s32 %s267, %s265
          %s269 = smul.addr %s268, 8
          %s270 = scalar_lea.vmem %s1, %s269
          %s271 = smul.u32 8, %s25
        $region40: #{tpu_custom_call.1} parent=31 // pred_fallthru
          _
      $region32: #{tpu_custom_call.1} parent=5 // pred_fallthru
        _
      %p272 = scmp.le.s32.totalorder 1, %s17
      %p273 = scmp.lt.s32.totalorder %s17, 4
      %p274 = pnand %p272, %p273
      %p275 = pneg %p274
      // Predicated region
      $region41: #{tpu_custom_call.1} parent=5 // pred_check
        _
      $region42: #{tpu_custom_call.1} parent=5 // pred_check_branch
        %277 = sbr.rel (%p274) target = $region44
      $region43: #{tpu_custom_call.1} parent=5 // pred_region
        %s278 = ssub.s32 %s17, 1
        // Predicated region
        $region45: #{tpu_custom_call.1} parent=43 // pred_check
          %p279 = pneg %p106
        $region46: #{tpu_custom_call.1} parent=43 // pred_check_branch
          %281 = sbr.rel (%p279) target = $region48
        $region47: #{tpu_custom_call.1} parent=43 // pred_region
          %282 = dma.done [#allocation5], 1024
        $region48: #{tpu_custom_call.1} parent=43 // pred_fallthru
          _
        // Predicated region
        $region49: #{tpu_custom_call.1} parent=43 // pred_check
          %p283 = pneg %p148
        $region50: #{tpu_custom_call.1} parent=43 // pred_check_branch
          %285 = sbr.rel (%p283) target = $region52
        $region51: #{tpu_custom_call.1} parent=43 // pred_region
          %286 = dma.done [#allocation8], 512
        $region52: #{tpu_custom_call.1} parent=43 // pred_fallthru
          _
        %s287 = smul.u32 8, %s27
        %p288 = scmp.lt.s32.totalorder %s287, 23
        %s289 = scalar_select %p288, %s287, 23
        %p290 = scmp.lt.s32.totalorder %s26, 0
        %s291 = scalar_select %p290, %s26, 0
        %s292 = sadd.s32 %s291, %s289
        %s293 = smul.addr %s292, 8
        %s294 = scalar_lea.vmem %s0, %s293
        %p295 = pneg %p57
        %p296 = pneg %p54
        %s297 = smul.u32 8, %s27
        %p298 = scmp.lt.s32.totalorder %s297, 23
        %s299 = scalar_select %p298, %s297, 23
        %p300 = scmp.lt.s32.totalorder %s26, 0
        %s301 = scalar_select %p300, %s26, 0
        %s302 = sadd.s32 %s301, %s299
        %s303 = smul.addr %s302, 8
        %s304 = scalar_lea.vmem %s1, %s303
        %p305 = pneg %p85
        %p306 = pneg %p82
        %p307 = pneg %p106
        %p308 = pneg %p103
        %p309 = pneg %p127
        %p310 = pneg %p124
        %p311 = pneg %p148
        %p312 = pneg %p145
        %p313 = pneg %p169
        %p314 = pneg %p166
        %p315 = pneg %p197
        %p316 = pneg %p194
        %s317 = sand.u32 %s184, 1
        %s318 = scalar_lea.sflag [#allocation6], %s317
        %s319 = sand.u32 %s184, 1
        %s320 = smul.addr %s319, 64
        %s321 = scalar_lea.vmem [#allocation9], %s320
        %s322 = smul.u32 8, %s27
        %p323 = scmp.lt.s32.totalorder %s322, 23
        %s324 = scalar_select %p323, %s322, 23
        %p325 = scmp.lt.s32.totalorder %s26, 0
        %s326 = scalar_select %p325, %s26, 0
        %s327 = sadd.s32 %s326, %s324
        %s328 = smul.addr %s327, 8
        %s329 = scalar_lea.vmem %s0, %s328
        %s330 = smul.u32 8, %s27
        %s331 = smul.u32 8, %s27
        %p332 = scmp.lt.s32.totalorder %s331, 23
        %s333 = scalar_select %p332, %s331, 23
        %p334 = scmp.lt.s32.totalorder %s26, 0
        %s335 = scalar_select %p334, %s26, 0
        %s336 = sadd.s32 %s335, %s333
        %s337 = smul.addr %s336, 8
        %s338 = scalar_lea.vmem %s1, %s337
        %s339 = smul.u32 8, %s27
        %s340 = smul.u32 8, %s27
        %p341 = scmp.eq.s32.totalorder %s27, 0
        // Predicated region
        $region53: #{tpu_custom_call.1} parent=43 // pred_check
          %p342 = pneg %p341
        $region54: #{tpu_custom_call.1} parent=43 // pred_check_branch
          %344 = sbr.rel (%p342) target = $region56
        $region55: #{tpu_custom_call.1} parent=43 // pred_region
          %vm345 = vcmask 261120
          %346 = vst.msk [vmem:[#allocation2] sm:$0xff] %vm345, 0.0
          %347 = vst.msk [vmem:[#allocation3] sm:$0xff] %vm345, 0.0
        $region56: #{tpu_custom_call.1} parent=43 // pred_fallthru
          _
        %v348 = vld [vmem:[#allocation4] sm:$0xff]
        %v349 = vld [vmem:[#allocation4 + $0x8] sm:$0xff]
        %v350 = vld [vmem:[#allocation4 + $0x10] sm:$0xff]
        %v351 = vld [vmem:[#allocation4 + $0x18] sm:$0xff]
        %v352 = vld [vmem:[#allocation4 + $0x20] sm:$0xff]
        %v353 = vld [vmem:[#allocation4 + $0x28] sm:$0xff]
        %v354 = vld [vmem:[#allocation4 + $0x30] sm:$0xff]
        %v355 = vld [vmem:[#allocation4 + $0x38] sm:$0xff]
        %v356 = vld [vmem:[%s3] sm:$0x1]
        %v357 = vld [vmem:[#allocation7] sm:$0xff]
        %v358 = vld [vmem:[#allocation7 + $0x8] sm:$0xff]
        %v359 = vld [vmem:[#allocation7 + $0x10] sm:$0xff]
        %v360 = vld [vmem:[#allocation7 + $0x18] sm:$0xff]
        %v361 = vld [vmem:[%s5] sm:$0x1]
        %v362 = vld [vmem:[#allocation2] sm:$0xff]
        %v363 = vld [vmem:[#allocation3] sm:$0xff]
        %v364 = vld [vmem:[%s329] sm:$0xff]
        %v365 = vld [vmem:[%s338] sm:$0xff]
        %v367 = vlaneseq
        %v368 = vshrl.u32 %v367, 7
        %v369 = vsub.s32 0, %v368
        %v370 = vrot.slane %v361, %v369
        %vm372 = vcmask 261120
        %v374 = vsel %vm372, %v363, 0
        %376 = vmatprep.subr.mxu0 0.0
        %377 = vmatpush1.msra.mxu0 %v357
        %378 = vmatprep.subr.mxu0 0.0
        %379 = vmatpush1.msra.mxu0 %v358
        %380 = vmatprep.subr.mxu0 0.0
        %381 = vmatpush1.msra.mxu0 %v359
        %382 = vmatprep.subr.mxu0 0.0
        %383 = vmatpush1.msra.mxu0 %v360
        %384 = vmatprep.subr.mxu0 0.0
        %385 = vmatpush1.msra.mxu0 0.0
        %386 = vmatprep.subr.mxu0 0.0
        %387 = vmatpush1.msra.mxu0 0.0
        %388 = vmatprep.subr.mxu0 0.0
        %389 = vmatpush1.msra.mxu0 0.0
        %390 = vmatprep.subr.mxu0 0.0
        %391 = vmatpush1.msra.mxu0 0.0
        %392 = vmatprep.subr.mxu0 0.0
        %393 = vmatpush1.msra.mxu0 0.0
        %394 = vmatprep.subr.mxu0 0.0
        %395 = vmatpush1.msra.mxu0 0.0
        %396 = vmatprep.subr.mxu0 0.0
        %397 = vmatpush1.msra.mxu0 0.0
        %398 = vmatprep.subr.mxu0 0.0
        %399 = vmatpush1.msra.mxu0 0.0
        %400 = vmatprep.subr.mxu0 0.0
        %401 = vmatpush1.msra.mxu0 0.0
        %402 = vmatprep.subr.mxu0 0.0
        %403 = vmatpush1.msra.mxu0 0.0
        %404 = vmatprep.subr.mxu0 0.0
        %405 = vmatpush1.msra.mxu0 0.0
        %406 = vmatprep.subr.mxu0 0.0
        %407 = vmatpush1.msra.mxu0 0.0
        %408 = vmatprep.subr.mxu0 0.0
        %409 = vmatpush1.msra.mxu0 0.0
        %410 = vmatprep.subr.mxu0 0.0
        %411 = vmatpush1.msra.mxu0 0.0
        %412 = vmatprep.subr.mxu0 0.0
        %413 = vmatpush1.msra.mxu0 0.0
        %414 = vmatprep.subr.mxu0 0.0
        %415 = vmatpush1.msra.mxu0 0.0
        %416 = vmatprep.subr.mxu0 0.0
        %417 = vmatpush1.msra.mxu0 0.0
        %418 = vmatprep.subr.mxu0 0.0
        %419 = vmatpush1.msra.mxu0 0.0
        %420 = vmatprep.subr.mxu0 0.0
        %421 = vmatpush1.msra.mxu0 0.0
        %422 = vmatprep.subr.mxu0 0.0
        %423 = vmatpush1.msra.mxu0 0.0
        %424 = vmatprep.subr.mxu0 0.0
        %425 = vmatpush1.msra.mxu0 0.0
        %426 = vmatprep.subr.mxu0 0.0
        %427 = vmatpush1.msra.mxu0 0.0
        %428 = vmatprep.subr.mxu0 0.0
        %429 = vmatpush1.msra.mxu0 0.0
        %430 = vmatprep.subr.mxu0 0.0
        %431 = vmatpush1.msra.mxu0 0.0
        %432 = vmatprep.subr.mxu0 0.0
        %433 = vmatpush1.msra.mxu0 0.0
        %434 = vmatprep.subr.mxu0 0.0
        %435 = vmatpush1.msra.mxu0 0.0
        %436 = vmatprep.subr.mxu0 0.0
        %437 = vmatpush1.msra.mxu0 0.0
        %438 = vmatprep.subr.mxu0 0.0
        %439 = vmatpush1.msra.mxu0 0.0
        %440 = vmatprep.mubr.f32.mxu0 0.0
        %441 = vmatmul.mubr.f32.gmra.mrb[0].mxu0 %v374
        %v442 = vpop.f32.mrb[0].mxu0
        %v443 = vadd.f32 %v370, %v442
        %v444 = vpop.f32.mrb[0].mxu0
        %445 = vdwg.mxu0
        %v446 = vtanh.pop %v443
        %448 = vset.pattern.permute.xlu0 0
        %449 = vperm.xlu0 %448, %v365
        %v450 = vpop.permute.xlu0 %449
        %v452 = vmul.f32 %v446, %v450
        %v453 = vadd.f32 %v363, %v452
        %455 = vrot.lane.b32.xlu0 %v364, 32
        %v456 = vpop.permute.xlu0 %455
        %v458 = vsel %vm372, %v362, %v456
        %v460 = vlaneseq
        %v461 = vshrl.u32 %v460, 7
        %v462 = vsub.s32 0, %v461
        %v463 = vrot.slane %v356, %v462
        %vm465 = vcmask 523264
        %v467 = vsel %vm465, %v458, 0
        %469 = vmatprep.subr.mxu0 0.0
        %470 = vmatpush1.msra.mxu0 %v348
        %471 = vmatprep.subr.mxu0 0.0
        %472 = vmatpush1.msra.mxu0 %v349
        %473 = vmatprep.subr.mxu0 0.0
        %474 = vmatpush1.msra.mxu0 %v350
        %475 = vmatprep.subr.mxu0 0.0
        %476 = vmatpush1.msra.mxu0 %v351
        %477 = vmatprep.subr.mxu0 0.0
        %478 = vmatpush1.msra.mxu0 %v352
        %479 = vmatprep.subr.mxu0 0.0
        %480 = vmatpush1.msra.mxu0 %v353
        %481 = vmatprep.subr.mxu0 0.0
        %482 = vmatpush1.msra.mxu0 %v354
        %483 = vmatprep.subr.mxu0 0.0
        %484 = vmatpush1.msra.mxu0 %v355
        %485 = vmatprep.subr.mxu0 0.0
        %486 = vmatpush1.msra.mxu0 0.0
        %487 = vmatprep.subr.mxu0 0.0
        %488 = vmatpush1.msra.mxu0 0.0
        %489 = vmatprep.subr.mxu0 0.0
        %490 = vmatpush1.msra.mxu0 0.0
        %491 = vmatprep.subr.mxu0 0.0
        %492 = vmatpush1.msra.mxu0 0.0
        %493 = vmatprep.subr.mxu0 0.0
        %494 = vmatpush1.msra.mxu0 0.0
        %495 = vmatprep.subr.mxu0 0.0
        %496 = vmatpush1.msra.mxu0 0.0
        %497 = vmatprep.subr.mxu0 0.0
        %498 = vmatpush1.msra.mxu0 0.0
        %499 = vmatprep.subr.mxu0 0.0
        %500 = vmatpush1.msra.mxu0 0.0
        %501 = vmatprep.subr.mxu0 0.0
        %502 = vmatpush1.msra.mxu0 0.0
        %503 = vmatprep.subr.mxu0 0.0
        %504 = vmatpush1.msra.mxu0 0.0
        %505 = vmatprep.subr.mxu0 0.0
        %506 = vmatpush1.msra.mxu0 0.0
        %507 = vmatprep.subr.mxu0 0.0
        %508 = vmatpush1.msra.mxu0 0.0
        %509 = vmatprep.subr.mxu0 0.0
        %510 = vmatpush1.msra.mxu0 0.0
        %511 = vmatprep.subr.mxu0 0.0
        %512 = vmatpush1.msra.mxu0 0.0
        %513 = vmatprep.subr.mxu0 0.0
        %514 = vmatpush1.msra.mxu0 0.0
        %515 = vmatprep.subr.mxu0 0.0
        %516 = vmatpush1.msra.mxu0 0.0
        %517 = vmatprep.subr.mxu0 0.0
        %518 = vmatpush1.msra.mxu0 0.0
        %519 = vmatprep.subr.mxu0 0.0
        %520 = vmatpush1.msra.mxu0 0.0
        %521 = vmatprep.subr.mxu0 0.0
        %522 = vmatpush1.msra.mxu0 0.0
        %523 = vmatprep.subr.mxu0 0.0
        %524 = vmatpush1.msra.mxu0 0.0
        %525 = vmatprep.subr.mxu0 0.0
        %526 = vmatpush1.msra.mxu0 0.0
        %527 = vmatprep.subr.mxu0 0.0
        %528 = vmatpush1.msra.mxu0 0.0
        %529 = vmatprep.subr.mxu0 0.0
        %530 = vmatpush1.msra.mxu0 0.0
        %531 = vmatprep.subr.mxu0 0.0
        %532 = vmatpush1.msra.mxu0 0.0
        %533 = vmatprep.mubr.f32.mxu0 0.0
        %534 = vmatmul.mubr.f32.gmra.mrb[0].mxu0 %v467
        %v535 = vpop.f32.mrb[0].mxu0
        %v536 = vadd.f32 %v463, %v535
        %v537 = vpop.f32.mrb[0].mxu0
        %538 = vdwg.mxu0
        %v539 = vxor.u32 %v536, 2147483648
        %v540 = vmul.f32 %v539, 1.442695
        %v541 = vpow.pop %v540
        %v542 = vadd.f32 %v541, 1.0
        %v543 = vrcp.pop %v542
        %v544 = vmul.f32 1.0, %v543
        %v545 = vmul.f32 %v544, %v453
        %547 = vrot.lane.b32.xlu0 %v544, 64
        %v548 = vpop.permute.xlu0 %547
        %v550 = vmul.f32 %v544, %v548
        %552 = vrot.lane.b32.xlu0 %v550, 96
        %v553 = vpop.permute.xlu0 %552
        %v555 = vadd.f32 %v545, %v553
        %v556 = vtanh.pop %v555
        %558 = vrot.lane.b32.xlu0 %v556, 64
        %v559 = vpop.permute.xlu0 %558
        %v561 = vmul.f32 %v544, %v559
        %563 = vrot.lane.b32.xlu0 %v561, 64
        %v564 = vpop.permute.xlu0 %563
        %566 = vst.msk [vmem:[%s321] sm:$0xff] %vm372, %v564
        %s567 = scalar_lea.vmem %s329, 8
        %v568 = vld [vmem:[%s567] sm:$0xff]
        %s569 = scalar_lea.vmem %s338, 8
        %v570 = vld [vmem:[%s569] sm:$0xff]
        %v572 = vsel %vm372, %v555, 0
        %574 = vmatprep.subr.mxu0 0.0
        %575 = vmatpush1.msra.mxu0 %v357
        %576 = vmatprep.subr.mxu0 0.0
        %577 = vmatpush1.msra.mxu0 %v358
        %578 = vmatprep.subr.mxu0 0.0
        %579 = vmatpush1.msra.mxu0 %v359
        %580 = vmatprep.subr.mxu0 0.0
        %581 = vmatpush1.msra.mxu0 %v360
        %582 = vmatprep.subr.mxu0 0.0
        %583 = vmatpush1.msra.mxu0 0.0
        %584 = vmatprep.subr.mxu0 0.0
        %585 = vmatpush1.msra.mxu0 0.0
        %586 = vmatprep.subr.mxu0 0.0
        %587 = vmatpush1.msra.mxu0 0.0
        %588 = vmatprep.subr.mxu0 0.0
        %589 = vmatpush1.msra.mxu0 0.0
        %590 = vmatprep.subr.mxu0 0.0
        %591 = vmatpush1.msra.mxu0 0.0
        %592 = vmatprep.subr.mxu0 0.0
        %593 = vmatpush1.msra.mxu0 0.0
        %594 = vmatprep.subr.mxu0 0.0
        %595 = vmatpush1.msra.mxu0 0.0
        %596 = vmatprep.subr.mxu0 0.0
        %597 = vmatpush1.msra.mxu0 0.0
        %598 = vmatprep.subr.mxu0 0.0
        %599 = vmatpush1.msra.mxu0 0.0
        %600 = vmatprep.subr.mxu0 0.0
        %601 = vmatpush1.msra.mxu0 0.0
        %602 = vmatprep.subr.mxu0 0.0
        %603 = vmatpush1.msra.mxu0 0.0
        %604 = vmatprep.subr.mxu0 0.0
        %605 = vmatpush1.msra.mxu0 0.0
        %606 = vmatprep.subr.mxu0 0.0
        %607 = vmatpush1.msra.mxu0 0.0
        %608 = vmatprep.subr.mxu0 0.0
        %609 = vmatpush1.msra.mxu0 0.0
        %610 = vmatprep.subr.mxu0 0.0
        %611 = vmatpush1.msra.mxu0 0.0
        %612 = vmatprep.subr.mxu0 0.0
        %613 = vmatpush1.msra.mxu0 0.0
        %614 = vmatprep.subr.mxu0 0.0
        %615 = vmatpush1.msra.mxu0 0.0
        %616 = vmatprep.subr.mxu0 0.0
        %617 = vmatpush1.msra.mxu0 0.0
        %618 = vmatprep.subr.mxu0 0.0
        %619 = vmatpush1.msra.mxu0 0.0
        %620 = vmatprep.subr.mxu0 0.0
        %621 = vmatpush1.msra.mxu0 0.0
        %622 = vmatprep.subr.mxu0 0.0
        %623 = vmatpush1.msra.mxu0 0.0
        %624 = vmatprep.subr.mxu0 0.0
        %625 = vmatpush1.msra.mxu0 0.0
        %626 = vmatprep.subr.mxu0 0.0
        %627 = vmatpush1.msra.mxu0 0.0
        %628 = vmatprep.subr.mxu0 0.0
        %629 = vmatpush1.msra.mxu0 0.0
        %630 = vmatprep.subr.mxu0 0.0
        %631 = vmatpush1.msra.mxu0 0.0
        %632 = vmatprep.subr.mxu0 0.0
        %633 = vmatpush1.msra.mxu0 0.0
        %634 = vmatprep.subr.mxu0 0.0
        %635 = vmatpush1.msra.mxu0 0.0
        %636 = vmatprep.subr.mxu0 0.0
        %637 = vmatpush1.msra.mxu0 0.0
        %638 = vmatprep.mubr.f32.mxu0 0.0
        %639 = vmatmul.mubr.f32.gmra.mrb[0].mxu0 %v572
        %v640 = vpop.f32.mrb[0].mxu0
        %v641 = vadd.f32 %v370, %v640
        %v642 = vpop.f32.mrb[0].mxu0
        %643 = vdwg.mxu0
        %v644 = vtanh.pop %v641
        %646 = vset.pattern.permute.xlu0 0
        %647 = vperm.xlu0 %646, %v570
        %v648 = vpop.permute.xlu0 %647
        %v650 = vmul.f32 %v644, %v648
        %v651 = vadd.f32 %v555, %v650
        %653 = vrot.lane.b32.xlu0 %v568, 32
        %v654 = vpop.permute.xlu0 %653
        %v656 = vsel %vm372, %v564, %v654
        %v658 = vsel %vm465, %v656, 0
        %660 = vmatprep.subr.mxu0 0.0
        %661 = vmatpush1.msra.mxu0 %v348
        %662 = vmatprep.subr.mxu0 0.0
        %663 = vmatpush1.msra.mxu0 %v349
        %664 = vmatprep.subr.mxu0 0.0
        %665 = vmatpush1.msra.mxu0 %v350
        %666 = vmatprep.subr.mxu0 0.0
        %667 = vmatpush1.msra.mxu0 %v351
        %668 = vmatprep.subr.mxu0 0.0
        %669 = vmatpush1.msra.mxu0 %v352
        %670 = vmatprep.subr.mxu0 0.0
        %671 = vmatpush1.msra.mxu0 %v353
        %672 = vmatprep.subr.mxu0 0.0
        %673 = vmatpush1.msra.mxu0 %v354
        %674 = vmatprep.subr.mxu0 0.0
        %675 = vmatpush1.msra.mxu0 %v355
        %676 = vmatprep.subr.mxu0 0.0
        %677 = vmatpush1.msra.mxu0 0.0
        %678 = vmatprep.subr.mxu0 0.0
        %679 = vmatpush1.msra.mxu0 0.0
        %680 = vmatprep.subr.mxu0 0.0
        %681 = vmatpush1.msra.mxu0 0.0
        %682 = vmatprep.subr.mxu0 0.0
        %683 = vmatpush1.msra.mxu0 0.0
        %684 = vmatprep.subr.mxu0 0.0
        %685 = vmatpush1.msra.mxu0 0.0
        %686 = vmatprep.subr.mxu0 0.0
        %687 = vmatpush1.msra.mxu0 0.0
        %688 = vmatprep.subr.mxu0 0.0
        %689 = vmatpush1.msra.mxu0 0.0
        %690 = vmatprep.subr.mxu0 0.0
        %691 = vmatpush1.msra.mxu0 0.0
        %692 = vmatprep.subr.mxu0 0.0
        %693 = vmatpush1.msra.mxu0 0.0
        %694 = vmatprep.subr.mxu0 0.0
        %695 = vmatpush1.msra.mxu0 0.0
        %696 = vmatprep.subr.mxu0 0.0
        %697 = vmatpush1.msra.mxu0 0.0
        %698 = vmatprep.subr.mxu0 0.0
        %699 = vmatpush1.msra.mxu0 0.0
        %700 = vmatprep.subr.mxu0 0.0
        %701 = vmatpush1.msra.mxu0 0.0
        %702 = vmatprep.subr.mxu0 0.0
        %703 = vmatpush1.msra.mxu0 0.0
        %704 = vmatprep.subr.mxu0 0.0
        %705 = vmatpush1.msra.mxu0 0.0
        %706 = vmatprep.subr.mxu0 0.0
        %707 = vmatpush1.msra.mxu0 0.0
        %708 = vmatprep.subr.mxu0 0.0
        %709 = vmatpush1.msra.mxu0 0.0
        %710 = vmatprep.subr.mxu0 0.0
        %711 = vmatpush1.msra.mxu0 0.0
        %712 = vmatprep.subr.mxu0 0.0
        %713 = vmatpush1.msra.mxu0 0.0
        %714 = vmatprep.subr.mxu0 0.0
        %715 = vmatpush1.msra.mxu0 0.0
        %716 = vmatprep.subr.mxu0 0.0
        %717 = vmatpush1.msra.mxu0 0.0
        %718 = vmatprep.subr.mxu0 0.0
        %719 = vmatpush1.msra.mxu0 0.0
        %720 = vmatprep.subr.mxu0 0.0
        %721 = vmatpush1.msra.mxu0 0.0
        %722 = vmatprep.subr.mxu0 0.0
        %723 = vmatpush1.msra.mxu0 0.0
        %724 = vmatprep.mubr.f32.mxu0 0.0
        %725 = vmatmul.mubr.f32.gmra.mrb[0].mxu0 %v658
        %v726 = vpop.f32.mrb[0].mxu0
        %v727 = vadd.f32 %v463, %v726
        %v728 = vpop.f32.mrb[0].mxu0
        %729 = vdwg.mxu0
        %v730 = vxor.u32 %v727, 2147483648
        %v731 = vmul.f32 %v730, 1.442695
        %v732 = vpow.pop %v731
        %v733 = vadd.f32 %v732, 1.0
        %v734 = vrcp.pop %v733
        %v735 = vmul.f32 1.0, %v734
        %v736 = vmul.f32 %v735, %v651
        %738 = vrot.lane.b32.xlu0 %v735, 64
        %v739 = vpop.permute.xlu0 %738
        %v741 = vmul.f32 %v735, %v739
        %743 = vrot.lane.b32.xlu0 %v741, 96
        %v744 = vpop.permute.xlu0 %743
        %v746 = vadd.f32 %v736, %v744
        %v747 = vtanh.pop %v746
        %749 = vrot.lane.b32.xlu0 %v747, 64
        %v750 = vpop.permute.xlu0 %749
        %v752 = vmul.f32 %v735, %v750
        %754 = vrot.lane.b32.xlu0 %v752, 64
        %v755 = vpop.permute.xlu0 %754
        %s757 = scalar_lea.vmem %s321, 8 [#allocation9]
        %758 = vst.msk [vmem:[%s757] sm:$0xff] %vm372, %v755
        %s759 = scalar_lea.vmem %s329, 16
        %v760 = vld [vmem:[%s759] sm:$0xff]
        %s761 = scalar_lea.vmem %s338, 16
        %v762 = vld [vmem:[%s761] sm:$0xff]
        %v764 = vsel %vm372, %v746, 0
        %766 = vmatprep.subr.mxu0 0.0
        %767 = vmatpush1.msra.mxu0 %v357
        %768 = vmatprep.subr.mxu0 0.0
        %769 = vmatpush1.msra.mxu0 %v358
        %770 = vmatprep.subr.mxu0 0.0
        %771 = vmatpush1.msra.mxu0 %v359
        %772 = vmatprep.subr.mxu0 0.0
        %773 = vmatpush1.msra.mxu0 %v360
        %774 = vmatprep.subr.mxu0 0.0
        %775 = vmatpush1.msra.mxu0 0.0
        %776 = vmatprep.subr.mxu0 0.0
        %777 = vmatpush1.msra.mxu0 0.0
        %778 = vmatprep.subr.mxu0 0.0
        %779 = vmatpush1.msra.mxu0 0.0
        %780 = vmatprep.subr.mxu0 0.0
        %781 = vmatpush1.msra.mxu0 0.0
        %782 = vmatprep.subr.mxu0 0.0
        %783 = vmatpush1.msra.mxu0 0.0
        %784 = vmatprep.subr.mxu0 0.0
        %785 = vmatpush1.msra.mxu0 0.0
        %786 = vmatprep.subr.mxu0 0.0
        %787 = vmatpush1.msra.mxu0 0.0
        %788 = vmatprep.subr.mxu0 0.0
        %789 = vmatpush1.msra.mxu0 0.0
        %790 = vmatprep.subr.mxu0 0.0
        %791 = vmatpush1.msra.mxu0 0.0
        %792 = vmatprep.subr.mxu0 0.0
        %793 = vmatpush1.msra.mxu0 0.0
        %794 = vmatprep.subr.mxu0 0.0
        %795 = vmatpush1.msra.mxu0 0.0
        %796 = vmatprep.subr.mxu0 0.0
        %797 = vmatpush1.msra.mxu0 0.0
        %798 = vmatprep.subr.mxu0 0.0
        %799 = vmatpush1.msra.mxu0 0.0
        %800 = vmatprep.subr.mxu0 0.0
        %801 = vmatpush1.msra.mxu0 0.0
        %802 = vmatprep.subr.mxu0 0.0
        %803 = vmatpush1.msra.mxu0 0.0
        %804 = vmatprep.subr.mxu0 0.0
        %805 = vmatpush1.msra.mxu0 0.0
        %806 = vmatprep.subr.mxu0 0.0
        %807 = vmatpush1.msra.mxu0 0.0
        %808 = vmatprep.subr.mxu0 0.0
        %809 = vmatpush1.msra.mxu0 0.0
        %810 = vmatprep.subr.mxu0 0.0
        %811 = vmatpush1.msra.mxu0 0.0
        %812 = vmatprep.subr.mxu0 0.0
        %813 = vmatpush1.msra.mxu0 0.0
        %814 = vmatprep.subr.mxu0 0.0
        %815 = vmatpush1.msra.mxu0 0.0
        %816 = vmatprep.subr.mxu0 0.0
        %817 = vmatpush1.msra.mxu0 0.0
        %818 = vmatprep.subr.mxu0 0.0
        %819 = vmatpush1.msra.mxu0 0.0
        %820 = vmatprep.subr.mxu0 0.0
        %821 = vmatpush1.msra.mxu0 0.0
        %822 = vmatprep.subr.mxu0 0.0
        %823 = vmatpush1.msra.mxu0 0.0
        %824 = vmatprep.subr.mxu0 0.0
        %825 = vmatpush1.msra.mxu0 0.0
        %826 = vmatprep.subr.mxu0 0.0
        %827 = vmatpush1.msra.mxu0 0.0
        %828 = vmatprep.subr.mxu0 0.0
        %829 = vmatpush1.msra.mxu0 0.0
        %830 = vmatprep.mubr.f32.mxu0 0.0
        %831 = vmatmul.mubr.f32.gmra.mrb[0].mxu0 %v764
        %v832 = vpop.f32.mrb[0].mxu0
        %v833 = vadd.f32 %v370, %v832
        %v834 = vpop.f32.mrb[0].mxu0
        %835 = vdwg.mxu0
        %v836 = vtanh.pop %v833
        %838 = vset.pattern.permute.xlu0 0
        %839 = vperm.xlu0 %838, %v762
        %v840 = vpop.permute.xlu0 %839
        %v842 = vmul.f32 %v836, %v840
        %v843 = vadd.f32 %v746, %v842
        %845 = vrot.lane.b32.xlu0 %v760, 32
        %v846 = vpop.permute.xlu0 %845
        %v848 = vsel %vm372, %v755, %v846
        %v850 = vsel %vm465, %v848, 0
        %852 = vmatprep.subr.mxu0 0.0
        %853 = vmatpush1.msra.mxu0 %v348
        %854 = vmatprep.subr.mxu0 0.0
        %855 = vmatpush1.msra.mxu0 %v349
        %856 = vmatprep.subr.mxu0 0.0
        %857 = vmatpush1.msra.mxu0 %v350
        %858 = vmatprep.subr.mxu0 0.0
        %859 = vmatpush1.msra.mxu0 %v351
        %860 = vmatprep.subr.mxu0 0.0
        %861 = vmatpush1.msra.mxu0 %v352
        %862 = vmatprep.subr.mxu0 0.0
        %863 = vmatpush1.msra.mxu0 %v353
        %864 = vmatprep.subr.mxu0 0.0
        %865 = vmatpush1.msra.mxu0 %v354
        %866 = vmatprep.subr.mxu0 0.0
        %867 = vmatpush1.msra.mxu0 %v355
        %868 = vmatprep.subr.mxu0 0.0
        %869 = vmatpush1.msra.mxu0 0.0
        %870 = vmatprep.subr.mxu0 0.0
        %871 = vmatpush1.msra.mxu0 0.0
        %872 = vmatprep.subr.mxu0 0.0
        %873 = vmatpush1.msra.mxu0 0.0
        %874 = vmatprep.subr.mxu0 0.0
        %875 = vmatpush1.msra.mxu0 0.0
        %876 = vmatprep.subr.mxu0 0.0
        %877 = vmatpush1.msra.mxu0 0.0
        %878 = vmatprep.subr.mxu0 0.0
        %879 = vmatpush1.msra.mxu0 0.0
        %880 = vmatprep.subr.mxu0 0.0
        %881 = vmatpush1.msra.mxu0 0.0
        %882 = vmatprep.subr.mxu0 0.0
        %883 = vmatpush1.msra.mxu0 0.0
        %884 = vmatprep.subr.mxu0 0.0
        %885 = vmatpush1.msra.mxu0 0.0
        %886 = vmatprep.subr.mxu0 0.0
        %887 = vmatpush1.msra.mxu0 0.0
        %888 = vmatprep.subr.mxu0 0.0
        %889 = vmatpush1.msra.mxu0 0.0
        %890 = vmatprep.subr.mxu0 0.0
        %891 = vmatpush1.msra.mxu0 0.0
        %892 = vmatprep.subr.mxu0 0.0
        %893 = vmatpush1.msra.mxu0 0.0
        %894 = vmatprep.subr.mxu0 0.0
        %895 = vmatpush1.msra.mxu0 0.0
        %896 = vmatprep.subr.mxu0 0.0
        %897 = vmatpush1.msra.mxu0 0.0
        %898 = vmatprep.subr.mxu0 0.0
        %899 = vmatpush1.msra.mxu0 0.0
        %900 = vmatprep.subr.mxu0 0.0
        %901 = vmatpush1.msra.mxu0 0.0
        %902 = vmatprep.subr.mxu0 0.0
        %903 = vmatpush1.msra.mxu0 0.0
        %904 = vmatprep.subr.mxu0 0.0
        %905 = vmatpush1.msra.mxu0 0.0
        %906 = vmatprep.subr.mxu0 0.0
        %907 = vmatpush1.msra.mxu0 0.0
        %908 = vmatprep.subr.mxu0 0.0
        %909 = vmatpush1.msra.mxu0 0.0
        %910 = vmatprep.subr.mxu0 0.0
        %911 = vmatpush1.msra.mxu0 0.0
        %912 = vmatprep.subr.mxu0 0.0
        %913 = vmatpush1.msra.mxu0 0.0
        %914 = vmatprep.subr.mxu0 0.0
        %915 = vmatpush1.msra.mxu0 0.0
        %916 = vmatprep.mubr.f32.mxu0 0.0
        %917 = vmatmul.mubr.f32.gmra.mrb[0].mxu0 %v850
        %v918 = vpop.f32.mrb[0].mxu0
        %v919 = vadd.f32 %v463, %v918
        %v920 = vpop.f32.mrb[0].mxu0
        %921 = vdwg.mxu0
        %v922 = vxor.u32 %v919, 2147483648
        %v923 = vmul.f32 %v922, 1.442695
        %v924 = vpow.pop %v923
        %v925 = vadd.f32 %v924, 1.0
        %v926 = vrcp.pop %v925
        %v927 = vmul.f32 1.0, %v926
        %v928 = vmul.f32 %v927, %v843
        %930 = vrot.lane.b32.xlu0 %v927, 64
        %v931 = vpop.permute.xlu0 %930
        %v933 = vmul.f32 %v927, %v931
        %935 = vrot.lane.b32.xlu0 %v933, 96
        %v936 = vpop.permute.xlu0 %935
        %v938 = vadd.f32 %v928, %v936
        %v939 = vtanh.pop %v938
        %941 = vrot.lane.b32.xlu0 %v939, 64
        %v942 = vpop.permute.xlu0 %941
        %v944 = vmul.f32 %v927, %v942
        %946 = vrot.lane.b32.xlu0 %v944, 64
        %v947 = vpop.permute.xlu0 %946
        %s949 = scalar_lea.vmem %s321, 16 [#allocation9]
        %950 = vst.msk [vmem:[%s949] sm:$0xff] %vm372, %v947
        %s951 = scalar_lea.vmem %s329, 24
        %v952 = vld [vmem:[%s951] sm:$0xff]
        %s953 = scalar_lea.vmem %s338, 24
        %v954 = vld [vmem:[%s953] sm:$0xff]
        %v956 = vsel %vm372, %v938, 0
        %958 = vmatprep.subr.mxu0 0.0
        %959 = vmatpush1.msra.mxu0 %v357
        %960 = vmatprep.subr.mxu0 0.0
        %961 = vmatpush1.msra.mxu0 %v358
        %962 = vmatprep.subr.mxu0 0.0
        %963 = vmatpush1.msra.mxu0 %v359
        %964 = vmatprep.subr.mxu0 0.0
        %965 = vmatpush1.msra.mxu0 %v360
        %966 = vmatprep.subr.mxu0 0.0
        %967 = vmatpush1.msra.mxu0 0.0
        %968 = vmatprep.subr.mxu0 0.0
        %969 = vmatpush1.msra.mxu0 0.0
        %970 = vmatprep.subr.mxu0 0.0
        %971 = vmatpush1.msra.mxu0 0.0
        %972 = vmatprep.subr.mxu0 0.0
        %973 = vmatpush1.msra.mxu0 0.0
        %974 = vmatprep.subr.mxu0 0.0
        %975 = vmatpush1.msra.mxu0 0.0
        %976 = vmatprep.subr.mxu0 0.0
        %977 = vmatpush1.msra.mxu0 0.0
        %978 = vmatprep.subr.mxu0 0.0
        %979 = vmatpush1.msra.mxu0 0.0
        %980 = vmatprep.subr.mxu0 0.0
        %981 = vmatpush1.msra.mxu0 0.0
        %982 = vmatprep.subr.mxu0 0.0
        %983 = vmatpush1.msra.mxu0 0.0
        %984 = vmatprep.subr.mxu0 0.0
        %985 = vmatpush1.msra.mxu0 0.0
        %986 = vmatprep.subr.mxu0 0.0
        %987 = vmatpush1.msra.mxu0 0.0
        %988 = vmatprep.subr.mxu0 0.0
        %989 = vmatpush1.msra.mxu0 0.0
        %990 = vmatprep.subr.mxu0 0.0
        %991 = vmatpush1.msra.mxu0 0.0
        %992 = vmatprep.subr.mxu0 0.0
        %993 = vmatpush1.msra.mxu0 0.0
        %994 = vmatprep.subr.mxu0 0.0
        %995 = vmatpush1.msra.mxu0 0.0
        %996 = vmatprep.subr.mxu0 0.0
        %997 = vmatpush1.msra.mxu0 0.0
        %998 = vmatprep.subr.mxu0 0.0
        %999 = vmatpush1.msra.mxu0 0.0
        %1000 = vmatprep.subr.mxu0 0.0
        %1001 = vmatpush1.msra.mxu0 0.0
        %1002 = vmatprep.subr.mxu0 0.0
        %1003 = vmatpush1.msra.mxu0 0.0
        %1004 = vmatprep.subr.mxu0 0.0
        %1005 = vmatpush1.msra.mxu0 0.0
        %1006 = vmatprep.subr.mxu0 0.0
        %1007 = vmatpush1.msra.mxu0 0.0
        %1008 = vmatprep.subr.mxu0 0.0
        %1009 = vmatpush1.msra.mxu0 0.0
        %1010 = vmatprep.subr.mxu0 0.0
        %1011 = vmatpush1.msra.mxu0 0.0
        %1012 = vmatprep.subr.mxu0 0.0
        %1013 = vmatpush1.msra.mxu0 0.0
        %1014 = vmatprep.subr.mxu0 0.0
        %1015 = vmatpush1.msra.mxu0 0.0
        %1016 = vmatprep.subr.mxu0 0.0
        %1017 = vmatpush1.msra.mxu0 0.0
        %1018 = vmatprep.subr.mxu0 0.0
        %1019 = vmatpush1.msra.mxu0 0.0
        %1020 = vmatprep.subr.mxu0 0.0
        %1021 = vmatpush1.msra.mxu0 0.0
        %1022 = vmatprep.mubr.f32.mxu0 0.0
        %1023 = vmatmul.mubr.f32.gmra.mrb[0].mxu0 %v956
        %v1024 = vpop.f32.mrb[0].mxu0
        %v1025 = vadd.f32 %v370, %v1024
        %v1026 = vpop.f32.mrb[0].mxu0
        %1027 = vdwg.mxu0
        %v1028 = vtanh.pop %v1025
        %1030 = vset.pattern.permute.xlu0 0
        %1031 = vperm.xlu0 %1030, %v954
        %v1032 = vpop.permute.xlu0 %1031
        %v1034 = vmul.f32 %v1028, %v1032
        %v1035 = vadd.f32 %v938, %v1034
        %1037 = vrot.lane.b32.xlu0 %v952, 32
        %v1038 = vpop.permute.xlu0 %1037
        %v1040 = vsel %vm372, %v947, %v1038
        %v1042 = vsel %vm465, %v1040, 0
        %1044 = vmatprep.subr.mxu0 0.0
        %1045 = vmatpush1.msra.mxu0 %v348
        %1046 = vmatprep.subr.mxu0 0.0
        %1047 = vmatpush1.msra.mxu0 %v349
        %1048 = vmatprep.subr.mxu0 0.0
        %1049 = vmatpush1.msra.mxu0 %v350
        %1050 = vmatprep.subr.mxu0 0.0
        %1051 = vmatpush1.msra.mxu0 %v351
        %1052 = vmatprep.subr.mxu0 0.0
        %1053 = vmatpush1.msra.mxu0 %v352
        %1054 = vmatprep.subr.mxu0 0.0
        %1055 = vmatpush1.msra.mxu0 %v353
        %1056 = vmatprep.subr.mxu0 0.0
        %1057 = vmatpush1.msra.mxu0 %v354
        %1058 = vmatprep.subr.mxu0 0.0
        %1059 = vmatpush1.msra.mxu0 %v355
        %1060 = vmatprep.subr.mxu0 0.0
        %1061 = vmatpush1.msra.mxu0 0.0
        %1062 = vmatprep.subr.mxu0 0.0
        %1063 = vmatpush1.msra.mxu0 0.0
        %1064 = vmatprep.subr.mxu0 0.0
        %1065 = vmatpush1.msra.mxu0 0.0
        %1066 = vmatprep.subr.mxu0 0.0
        %1067 = vmatpush1.msra.mxu0 0.0
        %1068 = vmatprep.subr.mxu0 0.0
        %1069 = vmatpush1.msra.mxu0 0.0
        %1070 = vmatprep.subr.mxu0 0.0
        %1071 = vmatpush1.msra.mxu0 0.0
        %1072 = vmatprep.subr.mxu0 0.0
        %1073 = vmatpush1.msra.mxu0 0.0
        %1074 = vmatprep.subr.mxu0 0.0
        %1075 = vmatpush1.msra.mxu0 0.0
        %1076 = vmatprep.subr.mxu0 0.0
        %1077 = vmatpush1.msra.mxu0 0.0
        %1078 = vmatprep.subr.mxu0 0.0
        %1079 = vmatpush1.msra.mxu0 0.0
        %1080 = vmatprep.subr.mxu0 0.0
        %1081 = vmatpush1.msra.mxu0 0.0
        %1082 = vmatprep.subr.mxu0 0.0
        %1083 = vmatpush1.msra.mxu0 0.0
        %1084 = vmatprep.subr.mxu0 0.0
        %1085 = vmatpush1.msra.mxu0 0.0
        %1086 = vmatprep.subr.mxu0 0.0
        %1087 = vmatpush1.msra.mxu0 0.0
        %1088 = vmatprep.subr.mxu0 0.0
        %1089 = vmatpush1.msra.mxu0 0.0
        %1090 = vmatprep.subr.mxu0 0.0
        %1091 = vmatpush1.msra.mxu0 0.0
        %1092 = vmatprep.subr.mxu0 0.0
        %1093 = vmatpush1.msra.mxu0 0.0
        %1094 = vmatprep.subr.mxu0 0.0
        %1095 = vmatpush1.msra.mxu0 0.0
        %1096 = vmatprep.subr.mxu0 0.0
        %1097 = vmatpush1.msra.mxu0 0.0
        %1098 = vmatprep.subr.mxu0 0.0
        %1099 = vmatpush1.msra.mxu0 0.0
        %1100 = vmatprep.subr.mxu0 0.0
        %1101 = vmatpush1.msra.mxu0 0.0
        %1102 = vmatprep.subr.mxu0 0.0
        %1103 = vmatpush1.msra.mxu0 0.0
        %1104 = vmatprep.subr.mxu0 0.0
        %1105 = vmatpush1.msra.mxu0 0.0
        %1106 = vmatprep.subr.mxu0 0.0
        %1107 = vmatpush1.msra.mxu0 0.0
        %1108 = vmatprep.mubr.f32.mxu0 0.0
        %1109 = vmatmul.mubr.f32.gmra.mrb[0].mxu0 %v1042
        %v1110 = vpop.f32.mrb[0].mxu0
        %v1111 = vadd.f32 %v463, %v1110
        %v1112 = vpop.f32.mrb[0].mxu0
        %1113 = vdwg.mxu0
        %v1114 = vxor.u32 %v1111, 2147483648
        %v1115 = vmul.f32 %v1114, 1.442695
        %v1116 = vpow.pop %v1115
        %v1117 = vadd.f32 %v1116, 1.0
        %v1118 = vrcp.pop %v1117
        %v1119 = vmul.f32 1.0, %v1118
        %v1120 = vmul.f32 %v1119, %v1035
        %1122 = vrot.lane.b32.xlu0 %v1119, 64
        %v1123 = vpop.permute.xlu0 %1122
        %v1125 = vmul.f32 %v1119, %v1123
        %1127 = vrot.lane.b32.xlu0 %v1125, 96
        %v1128 = vpop.permute.xlu0 %1127
        %v1130 = vadd.f32 %v1120, %v1128
        %v1131 = vtanh.pop %v1130
        %1133 = vrot.lane.b32.xlu0 %v1131, 64
        %v1134 = vpop.permute.xlu0 %1133
        %v1136 = vmul.f32 %v1119, %v1134
        %1138 = vrot.lane.b32.xlu0 %v1136, 64
        %v1139 = vpop.permute.xlu0 %1138
        %s1141 = scalar_lea.vmem %s321, 24 [#allocation9]
        %1142 = vst.msk [vmem:[%s1141] sm:$0xff] %vm372, %v1139
        %s1143 = scalar_lea.vmem %s329, 32
        %v1144 = vld [vmem:[%s1143] sm:$0xff]
        %s1145 = scalar_lea.vmem %s338, 32
        %v1146 = vld [vmem:[%s1145] sm:$0xff]
        %v1148 = vsel %vm372, %v1130, 0
        %1150 = vmatprep.subr.mxu0 0.0
        %1151 = vmatpush1.msra.mxu0 %v357
        %1152 = vmatprep.subr.mxu0 0.0
        %1153 = vmatpush1.msra.mxu0 %v358
        %1154 = vmatprep.subr.mxu0 0.0
        %1155 = vmatpush1.msra.mxu0 %v359
        %1156 = vmatprep.subr.mxu0 0.0
        %1157 = vmatpush1.msra.mxu0 %v360
        %1158 = vmatprep.subr.mxu0 0.0
        %1159 = vmatpush1.msra.mxu0 0.0
        %1160 = vmatprep.subr.mxu0 0.0
        %1161 = vmatpush1.msra.mxu0 0.0
        %1162 = vmatprep.subr.mxu0 0.0
        %1163 = vmatpush1.msra.mxu0 0.0
        %1164 = vmatprep.subr.mxu0 0.0
        %1165 = vmatpush1.msra.mxu0 0.0
        %1166 = vmatprep.subr.mxu0 0.0
        %1167 = vmatpush1.msra.mxu0 0.0
        %1168 = vmatprep.subr.mxu0 0.0
        %1169 = vmatpush1.msra.mxu0 0.0
        %1170 = vmatprep.subr.mxu0 0.0
        %1171 = vmatpush1.msra.mxu0 0.0
        %1172 = vmatprep.subr.mxu0 0.0
        %1173 = vmatpush1.msra.mxu0 0.0
        %1174 = vmatprep.subr.mxu0 0.0
        %1175 = vmatpush1.msra.mxu0 0.0
        %1176 = vmatprep.subr.mxu0 0.0
        %1177 = vmatpush1.msra.mxu0 0.0
        %1178 = vmatprep.subr.mxu0 0.0
        %1179 = vmatpush1.msra.mxu0 0.0
        %1180 = vmatprep.subr.mxu0 0.0
        %1181 = vmatpush1.msra.mxu0 0.0
        %1182 = vmatprep.subr.mxu0 0.0
        %1183 = vmatpush1.msra.mxu0 0.0
        %1184 = vmatprep.subr.mxu0 0.0
        %1185 = vmatpush1.msra.mxu0 0.0
        %1186 = vmatprep.subr.mxu0 0.0
        %1187 = vmatpush1.msra.mxu0 0.0
        %1188 = vmatprep.subr.mxu0 0.0
        %1189 = vmatpush1.msra.mxu0 0.0
        %1190 = vmatprep.subr.mxu0 0.0
        %1191 = vmatpush1.msra.mxu0 0.0
        %1192 = vmatprep.subr.mxu0 0.0
        %1193 = vmatpush1.msra.mxu0 0.0
        %1194 = vmatprep.subr.mxu0 0.0
        %1195 = vmatpush1.msra.mxu0 0.0
        %1196 = vmatprep.subr.mxu0 0.0
        %1197 = vmatpush1.msra.mxu0 0.0
        %1198 = vmatprep.subr.mxu0 0.0
        %1199 = vmatpush1.msra.mxu0 0.0
        %1200 = vmatprep.subr.mxu0 0.0
        %1201 = vmatpush1.msra.mxu0 0.0
        %1202 = vmatprep.subr.mxu0 0.0
        %1203 = vmatpush1.msra.mxu0 0.0
        %1204 = vmatprep.subr.mxu0 0.0
        %1205 = vmatpush1.msra.mxu0 0.0
        %1206 = vmatprep.subr.mxu0 0.0
        %1207 = vmatpush1.msra.mxu0 0.0
        %1208 = vmatprep.subr.mxu0 0.0
        %1209 = vmatpush1.msra.mxu0 0.0
        %1210 = vmatprep.subr.mxu0 0.0
        %1211 = vmatpush1.msra.mxu0 0.0
        %1212 = vmatprep.subr.mxu0 0.0
        %1213 = vmatpush1.msra.mxu0 0.0
        %1214 = vmatprep.mubr.f32.mxu0 0.0
        %1215 = vmatmul.mubr.f32.gmra.mrb[0].mxu0 %v1148
        %v1216 = vpop.f32.mrb[0].mxu0
        %v1217 = vadd.f32 %v370, %v1216
        %v1218 = vpop.f32.mrb[0].mxu0
        %1219 = vdwg.mxu0
        %v1220 = vtanh.pop %v1217
        %1222 = vset.pattern.permute.xlu0 0
        %1223 = vperm.xlu0 %1222, %v1146
        %v1224 = vpop.permute.xlu0 %1223
        %v1226 = vmul.f32 %v1220, %v1224
        %v1227 = vadd.f32 %v1130, %v1226
        %1229 = vrot.lane.b32.xlu0 %v1144, 32
        %v1230 = vpop.permute.xlu0 %1229
        %v1232 = vsel %vm372, %v1139, %v1230
        %v1234 = vsel %vm465, %v1232, 0
        %1236 = vmatprep.subr.mxu0 0.0
        %1237 = vmatpush1.msra.mxu0 %v348
        %1238 = vmatprep.subr.mxu0 0.0
        %1239 = vmatpush1.msra.mxu0 %v349
        %1240 = vmatprep.subr.mxu0 0.0
        %1241 = vmatpush1.msra.mxu0 %v350
        %1242 = vmatprep.subr.mxu0 0.0
        %1243 = vmatpush1.msra.mxu0 %v351
        %1244 = vmatprep.subr.mxu0 0.0
        %1245 = vmatpush1.msra.mxu0 %v352
        %1246 = vmatprep.subr.mxu0 0.0
        %1247 = vmatpush1.msra.mxu0 %v353
        %1248 = vmatprep.subr.mxu0 0.0
        %1249 = vmatpush1.msra.mxu0 %v354
        %1250 = vmatprep.subr.mxu0 0.0
        %1251 = vmatpush1.msra.mxu0 %v355
        %1252 = vmatprep.subr.mxu0 0.0
        %1253 = vmatpush1.msra.mxu0 0.0
        %1254 = vmatprep.subr.mxu0 0.0
        %1255 = vmatpush1.msra.mxu0 0.0
        %1256 = vmatprep.subr.mxu0 0.0
        %1257 = vmatpush1.msra.mxu0 0.0
        %1258 = vmatprep.subr.mxu0 0.0
        %1259 = vmatpush1.msra.mxu0 0.0
        %1260 = vmatprep.subr.mxu0 0.0
        %1261 = vmatpush1.msra.mxu0 0.0
        %1262 = vmatprep.subr.mxu0 0.0
        %1263 = vmatpush1.msra.mxu0 0.0
        %1264 = vmatprep.subr.mxu0 0.0
        %1265 = vmatpush1.msra.mxu0 0.0
        %1266 = vmatprep.subr.mxu0 0.0
        %1267 = vmatpush1.msra.mxu0 0.0
        %1268 = vmatprep.subr.mxu0 0.0
        %1269 = vmatpush1.msra.mxu0 0.0
        %1270 = vmatprep.subr.mxu0 0.0
        %1271 = vmatpush1.msra.mxu0 0.0
        %1272 = vmatprep.subr.mxu0 0.0
        %1273 = vmatpush1.msra.mxu0 0.0
        %1274 = vmatprep.subr.mxu0 0.0
        %1275 = vmatpush1.msra.mxu0 0.0
        %1276 = vmatprep.subr.mxu0 0.0
        %1277 = vmatpush1.msra.mxu0 0.0
        %1278 = vmatprep.subr.mxu0 0.0
        %1279 = vmatpush1.msra.mxu0 0.0
        %1280 = vmatprep.subr.mxu0 0.0
        %1281 = vmatpush1.msra.mxu0 0.0
        %1282 = vmatprep.subr.mxu0 0.0
        %1283 = vmatpush1.msra.mxu0 0.0
        %1284 = vmatprep.subr.mxu0 0.0
        %1285 = vmatpush1.msra.mxu0 0.0
        %1286 = vmatprep.subr.mxu0 0.0
        %1287 = vmatpush1.msra.mxu0 0.0
        %1288 = vmatprep.subr.mxu0 0.0
        %1289 = vmatpush1.msra.mxu0 0.0
        %1290 = vmatprep.subr.mxu0 0.0
        %1291 = vmatpush1.msra.mxu0 0.0
        %1292 = vmatprep.subr.mxu0 0.0
        %1293 = vmatpush1.msra.mxu0 0.0
        %1294 = vmatprep.subr.mxu0 0.0
        %1295 = vmatpush1.msra.mxu0 0.0
        %1296 = vmatprep.subr.mxu0 0.0
        %1297 = vmatpush1.msra.mxu0 0.0
        %1298 = vmatprep.subr.mxu0 0.0
        %1299 = vmatpush1.msra.mxu0 0.0
        %1300 = vmatprep.mubr.f32.mxu0 0.0
        %1301 = vmatmul.mubr.f32.gmra.mrb[0].mxu0 %v1234
        %v1302 = vpop.f32.mrb[0].mxu0
        %v1303 = vadd.f32 %v463, %v1302
        %v1304 = vpop.f32.mrb[0].mxu0
        %1305 = vdwg.mxu0
        %v1306 = vxor.u32 %v1303, 2147483648
        %v1307 = vmul.f32 %v1306, 1.442695
        %v1308 = vpow.pop %v1307
        %v1309 = vadd.f32 %v1308, 1.0
        %v1310 = vrcp.pop %v1309
        %v1311 = vmul.f32 1.0, %v1310
        %v1312 = vmul.f32 %v1311, %v1227
        %1314 = vrot.lane.b32.xlu0 %v1311, 64
        %v1315 = vpop.permute.xlu0 %1314
        %v1317 = vmul.f32 %v1311, %v1315
        %1319 = vrot.lane.b32.xlu0 %v1317, 96
        %v1320 = vpop.permute.xlu0 %1319
        %v1322 = vadd.f32 %v1312, %v1320
        %v1323 = vtanh.pop %v1322
        %1325 = vrot.lane.b32.xlu0 %v1323, 64
        %v1326 = vpop.permute.xlu0 %1325
        %v1328 = vmul.f32 %v1311, %v1326
        %1330 = vrot.lane.b32.xlu0 %v1328, 64
        %v1331 = vpop.permute.xlu0 %1330
        %s1333 = scalar_lea.vmem %s321, 32 [#allocation9]
        %1334 = vst.msk [vmem:[%s1333] sm:$0xff] %vm372, %v1331
        %s1335 = scalar_lea.vmem %s329, 40
        %v1336 = vld [vmem:[%s1335] sm:$0xff]
        %s1337 = scalar_lea.vmem %s338, 40
        %v1338 = vld [vmem:[%s1337] sm:$0xff]
        %v1340 = vsel %vm372, %v1322, 0
        %1342 = vmatprep.subr.mxu0 0.0
        %1343 = vmatpush1.msra.mxu0 %v357
        %1344 = vmatprep.subr.mxu0 0.0
        %1345 = vmatpush1.msra.mxu0 %v358
        %1346 = vmatprep.subr.mxu0 0.0
        %1347 = vmatpush1.msra.mxu0 %v359
        %1348 = vmatprep.subr.mxu0 0.0
        %1349 = vmatpush1.msra.mxu0 %v360
        %1350 = vmatprep.subr.mxu0 0.0
        %1351 = vmatpush1.msra.mxu0 0.0
        %1352 = vmatprep.subr.mxu0 0.0
        %1353 = vmatpush1.msra.mxu0 0.0
        %1354 = vmatprep.subr.mxu0 0.0
        %1355 = vmatpush1.msra.mxu0 0.0
        %1356 = vmatprep.subr.mxu0 0.0
        %1357 = vmatpush1.msra.mxu0 0.0
        %1358 = vmatprep.subr.mxu0 0.0
        %1359 = vmatpush1.msra.mxu0 0.0
        %1360 = vmatprep.subr.mxu0 0.0
        %1361 = vmatpush1.msra.mxu0 0.0
        %1362 = vmatprep.subr.mxu0 0.0
        %1363 = vmatpush1.msra.mxu0 0.0
        %1364 = vmatprep.subr.mxu0 0.0
        %1365 = vmatpush1.msra.mxu0 0.0
        %1366 = vmatprep.subr.mxu0 0.0
        %1367 = vmatpush1.msra.mxu0 0.0
        %1368 = vmatprep.subr.mxu0 0.0
        %1369 = vmatpush1.msra.mxu0 0.0
        %1370 = vmatprep.subr.mxu0 0.0
        %1371 = vmatpush1.msra.mxu0 0.0
        %1372 = vmatprep.subr.mxu0 0.0
        %1373 = vmatpush1.msra.mxu0 0.0
        %1374 = vmatprep.subr.mxu0 0.0
        %1375 = vmatpush1.msra.mxu0 0.0
        %1376 = vmatprep.subr.mxu0 0.0
        %1377 = vmatpush1.msra.mxu0 0.0
        %1378 = vmatprep.subr.mxu0 0.0
        %1379 = vmatpush1.msra.mxu0 0.0
        %1380 = vmatprep.subr.mxu0 0.0
        %1381 = vmatpush1.msra.mxu0 0.0
        %1382 = vmatprep.subr.mxu0 0.0
        %1383 = vmatpush1.msra.mxu0 0.0
        %1384 = vmatprep.subr.mxu0 0.0
        %1385 = vmatpush1.msra.mxu0 0.0
        %1386 = vmatprep.subr.mxu0 0.0
        %1387 = vmatpush1.msra.mxu0 0.0
        %1388 = vmatprep.subr.mxu0 0.0
        %1389 = vmatpush1.msra.mxu0 0.0
        %1390 = vmatprep.subr.mxu0 0.0
        %1391 = vmatpush1.msra.mxu0 0.0
        %1392 = vmatprep.subr.mxu0 0.0
        %1393 = vmatpush1.msra.mxu0 0.0
        %1394 = vmatprep.subr.mxu0 0.0
        %1395 = vmatpush1.msra.mxu0 0.0
        %1396 = vmatprep.subr.mxu0 0.0
        %1397 = vmatpush1.msra.mxu0 0.0
        %1398 = vmatprep.subr.mxu0 0.0
        %1399 = vmatpush1.msra.mxu0 0.0
        %1400 = vmatprep.subr.mxu0 0.0
        %1401 = vmatpush1.msra.mxu0 0.0
        %1402 = vmatprep.subr.mxu0 0.0
        %1403 = vmatpush1.msra.mxu0 0.0
        %1404 = vmatprep.subr.mxu0 0.0
        %1405 = vmatpush1.msra.mxu0 0.0
        %1406 = vmatprep.mubr.f32.mxu0 0.0
        %1407 = vmatmul.mubr.f32.gmra.mrb[0].mxu0 %v1340
        %v1408 = vpop.f32.mrb[0].mxu0
        %v1409 = vadd.f32 %v370, %v1408
        %v1410 = vpop.f32.mrb[0].mxu0
        %1411 = vdwg.mxu0
        %v1412 = vtanh.pop %v1409
        %1414 = vset.pattern.permute.xlu0 0
        %1415 = vperm.xlu0 %1414, %v1338
        %v1416 = vpop.permute.xlu0 %1415
        %v1418 = vmul.f32 %v1412, %v1416
        %v1419 = vadd.f32 %v1322, %v1418
        %1421 = vrot.lane.b32.xlu0 %v1336, 32
        %v1422 = vpop.permute.xlu0 %1421
        %v1424 = vsel %vm372, %v1331, %v1422
        %v1426 = vsel %vm465, %v1424, 0
        %1428 = vmatprep.subr.mxu0 0.0
        %1429 = vmatpush1.msra.mxu0 %v348
        %1430 = vmatprep.subr.mxu0 0.0
        %1431 = vmatpush1.msra.mxu0 %v349
        %1432 = vmatprep.subr.mxu0 0.0
        %1433 = vmatpush1.msra.mxu0 %v350
        %1434 = vmatprep.subr.mxu0 0.0
        %1435 = vmatpush1.msra.mxu0 %v351
        %1436 = vmatprep.subr.mxu0 0.0
        %1437 = vmatpush1.msra.mxu0 %v352
        %1438 = vmatprep.subr.mxu0 0.0
        %1439 = vmatpush1.msra.mxu0 %v353
        %1440 = vmatprep.subr.mxu0 0.0
        %1441 = vmatpush1.msra.mxu0 %v354
        %1442 = vmatprep.subr.mxu0 0.0
        %1443 = vmatpush1.msra.mxu0 %v355
        %1444 = vmatprep.subr.mxu0 0.0
        %1445 = vmatpush1.msra.mxu0 0.0
        %1446 = vmatprep.subr.mxu0 0.0
        %1447 = vmatpush1.msra.mxu0 0.0
        %1448 = vmatprep.subr.mxu0 0.0
        %1449 = vmatpush1.msra.mxu0 0.0
        %1450 = vmatprep.subr.mxu0 0.0
        %1451 = vmatpush1.msra.mxu0 0.0
        %1452 = vmatprep.subr.mxu0 0.0
        %1453 = vmatpush1.msra.mxu0 0.0
        %1454 = vmatprep.subr.mxu0 0.0
        %1455 = vmatpush1.msra.mxu0 0.0
        %1456 = vmatprep.subr.mxu0 0.0
        %1457 = vmatpush1.msra.mxu0 0.0
        %1458 = vmatprep.subr.mxu0 0.0
        %1459 = vmatpush1.msra.mxu0 0.0
        %1460 = vmatprep.subr.mxu0 0.0
        %1461 = vmatpush1.msra.mxu0 0.0
        %1462 = vmatprep.subr.mxu0 0.0
        %1463 = vmatpush1.msra.mxu0 0.0
        %1464 = vmatprep.subr.mxu0 0.0
        %1465 = vmatpush1.msra.mxu0 0.0
        %1466 = vmatprep.subr.mxu0 0.0
        %1467 = vmatpush1.msra.mxu0 0.0
        %1468 = vmatprep.subr.mxu0 0.0
        %1469 = vmatpush1.msra.mxu0 0.0
        %1470 = vmatprep.subr.mxu0 0.0
        %1471 = vmatpush1.msra.mxu0 0.0
        %1472 = vmatprep.subr.mxu0 0.0
        %1473 = vmatpush1.msra.mxu0 0.0
        %1474 = vmatprep.subr.mxu0 0.0
        %1475 = vmatpush1.msra.mxu0 0.0
        %1476 = vmatprep.subr.mxu0 0.0
        %1477 = vmatpush1.msra.mxu0 0.0
        %1478 = vmatprep.subr.mxu0 0.0
        %1479 = vmatpush1.msra.mxu0 0.0
        %1480 = vmatprep.subr.mxu0 0.0
        %1481 = vmatpush1.msra.mxu0 0.0
        %1482 = vmatprep.subr.mxu0 0.0
        %1483 = vmatpush1.msra.mxu0 0.0
        %1484 = vmatprep.subr.mxu0 0.0
        %1485 = vmatpush1.msra.mxu0 0.0
        %1486 = vmatprep.subr.mxu0 0.0
        %1487 = vmatpush1.msra.mxu0 0.0
        %1488 = vmatprep.subr.mxu0 0.0
        %1489 = vmatpush1.msra.mxu0 0.0
        %1490 = vmatprep.subr.mxu0 0.0
        %1491 = vmatpush1.msra.mxu0 0.0
        %1492 = vmatprep.mubr.f32.mxu0 0.0
        %1493 = vmatmul.mubr.f32.gmra.mrb[0].mxu0 %v1426
        %v1494 = vpop.f32.mrb[0].mxu0
        %v1495 = vadd.f32 %v463, %v1494
        %v1496 = vpop.f32.mrb[0].mxu0
        %1497 = vdwg.mxu0
        %v1498 = vxor.u32 %v1495, 2147483648
        %v1499 = vmul.f32 %v1498, 1.442695
        %v1500 = vpow.pop %v1499
        %v1501 = vadd.f32 %v1500, 1.0
        %v1502 = vrcp.pop %v1501
        %v1503 = vmul.f32 1.0, %v1502
        %v1504 = vmul.f32 %v1503, %v1419
        %1506 = vrot.lane.b32.xlu0 %v1503, 64
        %v1507 = vpop.permute.xlu0 %1506
        %v1509 = vmul.f32 %v1503, %v1507
        %1511 = vrot.lane.b32.xlu0 %v1509, 96
        %v1512 = vpop.permute.xlu0 %1511
        %v1514 = vadd.f32 %v1504, %v1512
        %v1515 = vtanh.pop %v1514
        %1517 = vrot.lane.b32.xlu0 %v1515, 64
        %v1518 = vpop.permute.xlu0 %1517
        %v1520 = vmul.f32 %v1503, %v1518
        %1522 = vrot.lane.b32.xlu0 %v1520, 64
        %v1523 = vpop.permute.xlu0 %1522
        %s1525 = scalar_lea.vmem %s321, 40 [#allocation9]
        %1526 = vst.msk [vmem:[%s1525] sm:$0xff] %vm372, %v1523
        %s1527 = scalar_lea.vmem %s329, 48
        %v1528 = vld [vmem:[%s1527] sm:$0xff]
        %s1529 = scalar_lea.vmem %s338, 48
        %v1530 = vld [vmem:[%s1529] sm:$0xff]
        %v1532 = vsel %vm372, %v1514, 0
        %1534 = vmatprep.subr.mxu0 0.0
        %1535 = vmatpush1.msra.mxu0 %v357
        %1536 = vmatprep.subr.mxu0 0.0
        %1537 = vmatpush1.msra.mxu0 %v358
        %1538 = vmatprep.subr.mxu0 0.0
        %1539 = vmatpush1.msra.mxu0 %v359
        %1540 = vmatprep.subr.mxu0 0.0
        %1541 = vmatpush1.msra.mxu0 %v360
        %1542 = vmatprep.subr.mxu0 0.0
        %1543 = vmatpush1.msra.mxu0 0.0
        %1544 = vmatprep.subr.mxu0 0.0
        %1545 = vmatpush1.msra.mxu0 0.0
        %1546 = vmatprep.subr.mxu0 0.0
        %1547 = vmatpush1.msra.mxu0 0.0
        %1548 = vmatprep.subr.mxu0 0.0
        %1549 = vmatpush1.msra.mxu0 0.0
        %1550 = vmatprep.subr.mxu0 0.0
        %1551 = vmatpush1.msra.mxu0 0.0
        %1552 = vmatprep.subr.mxu0 0.0
        %1553 = vmatpush1.msra.mxu0 0.0
        %1554 = vmatprep.subr.mxu0 0.0
        %1555 = vmatpush1.msra.mxu0 0.0
        %1556 = vmatprep.subr.mxu0 0.0
        %1557 = vmatpush1.msra.mxu0 0.0
        %1558 = vmatprep.subr.mxu0 0.0
        %1559 = vmatpush1.msra.mxu0 0.0
        %1560 = vmatprep.subr.mxu0 0.0
        %1561 = vmatpush1.msra.mxu0 0.0
        %1562 = vmatprep.subr.mxu0 0.0
        %1563 = vmatpush1.msra.mxu0 0.0
        %1564 = vmatprep.subr.mxu0 0.0
        %1565 = vmatpush1.msra.mxu0 0.0
        %1566 = vmatprep.subr.mxu0 0.0
        %1567 = vmatpush1.msra.mxu0 0.0
        %1568 = vmatprep.subr.mxu0 0.0
        %1569 = vmatpush1.msra.mxu0 0.0
        %1570 = vmatprep.subr.mxu0 0.0
        %1571 = vmatpush1.msra.mxu0 0.0
        %1572 = vmatprep.subr.mxu0 0.0
        %1573 = vmatpush1.msra.mxu0 0.0
        %1574 = vmatprep.subr.mxu0 0.0
        %1575 = vmatpush1.msra.mxu0 0.0
        %1576 = vmatprep.subr.mxu0 0.0
        %1577 = vmatpush1.msra.mxu0 0.0
        %1578 = vmatprep.subr.mxu0 0.0
        %1579 = vmatpush1.msra.mxu0 0.0
        %1580 = vmatprep.subr.mxu0 0.0
        %1581 = vmatpush1.msra.mxu0 0.0
        %1582 = vmatprep.subr.mxu0 0.0
        %1583 = vmatpush1.msra.mxu0 0.0
        %1584 = vmatprep.subr.mxu0 0.0
        %1585 = vmatpush1.msra.mxu0 0.0
        %1586 = vmatprep.subr.mxu0 0.0
        %1587 = vmatpush1.msra.mxu0 0.0
        %1588 = vmatprep.subr.mxu0 0.0
        %1589 = vmatpush1.msra.mxu0 0.0
        %1590 = vmatprep.subr.mxu0 0.0
        %1591 = vmatpush1.msra.mxu0 0.0
        %1592 = vmatprep.subr.mxu0 0.0
        %1593 = vmatpush1.msra.mxu0 0.0
        %1594 = vmatprep.subr.mxu0 0.0
        %1595 = vmatpush1.msra.mxu0 0.0
        %1596 = vmatprep.subr.mxu0 0.0
        %1597 = vmatpush1.msra.mxu0 0.0
        %1598 = vmatprep.mubr.f32.mxu0 0.0
        %1599 = vmatmul.mubr.f32.gmra.mrb[0].mxu0 %v1532
        %v1600 = vpop.f32.mrb[0].mxu0
        %v1601 = vadd.f32 %v370, %v1600
        %v1602 = vpop.f32.mrb[0].mxu0
        %1603 = vdwg.mxu0
        %v1604 = vtanh.pop %v1601
        %1606 = vset.pattern.permute.xlu0 0
        %1607 = vperm.xlu0 %1606, %v1530
        %v1608 = vpop.permute.xlu0 %1607
        %v1610 = vmul.f32 %v1604, %v1608
        %v1611 = vadd.f32 %v1514, %v1610
        %1613 = vrot.lane.b32.xlu0 %v1528, 32
        %v1614 = vpop.permute.xlu0 %1613
        %v1616 = vsel %vm372, %v1523, %v1614
        %v1618 = vsel %vm465, %v1616, 0
        %1620 = vmatprep.subr.mxu0 0.0
        %1621 = vmatpush1.msra.mxu0 %v348
        %1622 = vmatprep.subr.mxu0 0.0
        %1623 = vmatpush1.msra.mxu0 %v349
        %1624 = vmatprep.subr.mxu0 0.0
        %1625 = vmatpush1.msra.mxu0 %v350
        %1626 = vmatprep.subr.mxu0 0.0
        %1627 = vmatpush1.msra.mxu0 %v351
        %1628 = vmatprep.subr.mxu0 0.0
        %1629 = vmatpush1.msra.mxu0 %v352
        %1630 = vmatprep.subr.mxu0 0.0
        %1631 = vmatpush1.msra.mxu0 %v353
        %1632 = vmatprep.subr.mxu0 0.0
        %1633 = vmatpush1.msra.mxu0 %v354
        %1634 = vmatprep.subr.mxu0 0.0
        %1635 = vmatpush1.msra.mxu0 %v355
        %1636 = vmatprep.subr.mxu0 0.0
        %1637 = vmatpush1.msra.mxu0 0.0
        %1638 = vmatprep.subr.mxu0 0.0
        %1639 = vmatpush1.msra.mxu0 0.0
        %1640 = vmatprep.subr.mxu0 0.0
        %1641 = vmatpush1.msra.mxu0 0.0
        %1642 = vmatprep.subr.mxu0 0.0
        %1643 = vmatpush1.msra.mxu0 0.0
        %1644 = vmatprep.subr.mxu0 0.0
        %1645 = vmatpush1.msra.mxu0 0.0
        %1646 = vmatprep.subr.mxu0 0.0
        %1647 = vmatpush1.msra.mxu0 0.0
        %1648 = vmatprep.subr.mxu0 0.0
        %1649 = vmatpush1.msra.mxu0 0.0
        %1650 = vmatprep.subr.mxu0 0.0
        %1651 = vmatpush1.msra.mxu0 0.0
        %1652 = vmatprep.subr.mxu0 0.0
        %1653 = vmatpush1.msra.mxu0 0.0
        %1654 = vmatprep.subr.mxu0 0.0
        %1655 = vmatpush1.msra.mxu0 0.0
        %1656 = vmatprep.subr.mxu0 0.0
        %1657 = vmatpush1.msra.mxu0 0.0
        %1658 = vmatprep.subr.mxu0 0.0
        %1659 = vmatpush1.msra.mxu0 0.0
        %1660 = vmatprep.subr.mxu0 0.0
        %1661 = vmatpush1.msra.mxu0 0.0
        %1662 = vmatprep.subr.mxu0 0.0
        %1663 = vmatpush1.msra.mxu0 0.0
        %1664 = vmatprep.subr.mxu0 0.0
        %1665 = vmatpush1.msra.mxu0 0.0
        %1666 = vmatprep.subr.mxu0 0.0
        %1667 = vmatpush1.msra.mxu0 0.0
        %1668 = vmatprep.subr.mxu0 0.0
        %1669 = vmatpush1.msra.mxu0 0.0
        %1670 = vmatprep.subr.mxu0 0.0
        %1671 = vmatpush1.msra.mxu0 0.0
        %1672 = vmatprep.subr.mxu0 0.0
        %1673 = vmatpush1.msra.mxu0 0.0
        %1674 = vmatprep.subr.mxu0 0.0
        %1675 = vmatpush1.msra.mxu0 0.0
        %1676 = vmatprep.subr.mxu0 0.0
        %1677 = vmatpush1.msra.mxu0 0.0
        %1678 = vmatprep.subr.mxu0 0.0
        %1679 = vmatpush1.msra.mxu0 0.0
        %1680 = vmatprep.subr.mxu0 0.0
        %1681 = vmatpush1.msra.mxu0 0.0
        %1682 = vmatprep.subr.mxu0 0.0
        %1683 = vmatpush1.msra.mxu0 0.0
        %1684 = vmatprep.mubr.f32.mxu0 0.0
        %1685 = vmatmul.mubr.f32.gmra.mrb[0].mxu0 %v1618
        %v1686 = vpop.f32.mrb[0].mxu0
        %v1687 = vadd.f32 %v463, %v1686
        %v1688 = vpop.f32.mrb[0].mxu0
        %1689 = vdwg.mxu0
        %v1690 = vxor.u32 %v1687, 2147483648
        %v1691 = vmul.f32 %v1690, 1.442695
        %v1692 = vpow.pop %v1691
        %v1693 = vadd.f32 %v1692, 1.0
        %v1694 = vrcp.pop %v1693
        %v1695 = vmul.f32 1.0, %v1694
        %v1696 = vmul.f32 %v1695, %v1611
        %1698 = vrot.lane.b32.xlu0 %v1695, 64
        %v1699 = vpop.permute.xlu0 %1698
        %v1701 = vmul.f32 %v1695, %v1699
        %1703 = vrot.lane.b32.xlu0 %v1701, 96
        %v1704 = vpop.permute.xlu0 %1703
        %v1706 = vadd.f32 %v1696, %v1704
        %v1707 = vtanh.pop %v1706
        %1709 = vrot.lane.b32.xlu0 %v1707, 64
        %v1710 = vpop.permute.xlu0 %1709
        %v1712 = vmul.f32 %v1695, %v1710
        %1714 = vrot.lane.b32.xlu0 %v1712, 64
        %v1715 = vpop.permute.xlu0 %1714
        %s1717 = scalar_lea.vmem %s321, 48 [#allocation9]
        %1718 = vst.msk [vmem:[%s1717] sm:$0xff] %vm372, %v1715
        %s1719 = scalar_lea.vmem %s329, 56
        %v1720 = vld [vmem:[%s1719] sm:$0xff]
        %s1721 = scalar_lea.vmem %s338, 56
        %v1722 = vld [vmem:[%s1721] sm:$0xff]
        %v1724 = vsel %vm372, %v1706, 0
        %1726 = vmatprep.subr.mxu0 0.0
        %1727 = vmatpush1.msra.mxu0 %v357
        %1728 = vmatprep.subr.mxu0 0.0
        %1729 = vmatpush1.msra.mxu0 %v358
        %1730 = vmatprep.subr.mxu0 0.0
        %1731 = vmatpush1.msra.mxu0 %v359
        %1732 = vmatprep.subr.mxu0 0.0
        %1733 = vmatpush1.msra.mxu0 %v360
        %1734 = vmatprep.subr.mxu0 0.0
        %1735 = vmatpush1.msra.mxu0 0.0
        %1736 = vmatprep.subr.mxu0 0.0
        %1737 = vmatpush1.msra.mxu0 0.0
        %1738 = vmatprep.subr.mxu0 0.0
        %1739 = vmatpush1.msra.mxu0 0.0
        %1740 = vmatprep.subr.mxu0 0.0
        %1741 = vmatpush1.msra.mxu0 0.0
        %1742 = vmatprep.subr.mxu0 0.0
        %1743 = vmatpush1.msra.mxu0 0.0
        %1744 = vmatprep.subr.mxu0 0.0
        %1745 = vmatpush1.msra.mxu0 0.0
        %1746 = vmatprep.subr.mxu0 0.0
        %1747 = vmatpush1.msra.mxu0 0.0
        %1748 = vmatprep.subr.mxu0 0.0
        %1749 = vmatpush1.msra.mxu0 0.0
        %1750 = vmatprep.subr.mxu0 0.0
        %1751 = vmatpush1.msra.mxu0 0.0
        %1752 = vmatprep.subr.mxu0 0.0
        %1753 = vmatpush1.msra.mxu0 0.0
        %1754 = vmatprep.subr.mxu0 0.0
        %1755 = vmatpush1.msra.mxu0 0.0
        %1756 = vmatprep.subr.mxu0 0.0
        %1757 = vmatpush1.msra.mxu0 0.0
        %1758 = vmatprep.subr.mxu0 0.0
        %1759 = vmatpush1.msra.mxu0 0.0
        %1760 = vmatprep.subr.mxu0 0.0
        %1761 = vmatpush1.msra.mxu0 0.0
        %1762 = vmatprep.subr.mxu0 0.0
        %1763 = vmatpush1.msra.mxu0 0.0
        %1764 = vmatprep.subr.mxu0 0.0
        %1765 = vmatpush1.msra.mxu0 0.0
        %1766 = vmatprep.subr.mxu0 0.0
        %1767 = vmatpush1.msra.mxu0 0.0
        %1768 = vmatprep.subr.mxu0 0.0
        %1769 = vmatpush1.msra.mxu0 0.0
        %1770 = vmatprep.subr.mxu0 0.0
        %1771 = vmatpush1.msra.mxu0 0.0
        %1772 = vmatprep.subr.mxu0 0.0
        %1773 = vmatpush1.msra.mxu0 0.0
        %1774 = vmatprep.subr.mxu0 0.0
        %1775 = vmatpush1.msra.mxu0 0.0
        %1776 = vmatprep.subr.mxu0 0.0
        %1777 = vmatpush1.msra.mxu0 0.0
        %1778 = vmatprep.subr.mxu0 0.0
        %1779 = vmatpush1.msra.mxu0 0.0
        %1780 = vmatprep.subr.mxu0 0.0
        %1781 = vmatpush1.msra.mxu0 0.0
        %1782 = vmatprep.subr.mxu0 0.0
        %1783 = vmatpush1.msra.mxu0 0.0
        %1784 = vmatprep.subr.mxu0 0.0
        %1785 = vmatpush1.msra.mxu0 0.0
        %1786 = vmatprep.subr.mxu0 0.0
        %1787 = vmatpush1.msra.mxu0 0.0
        %1788 = vmatprep.subr.mxu0 0.0
        %1789 = vmatpush1.msra.mxu0 0.0
        %1790 = vmatprep.mubr.f32.mxu0 0.0
        %1791 = vmatmul.mubr.f32.gmra.mrb[0].mxu0 %v1724
        %v1792 = vpop.f32.mrb[0].mxu0
        %v1793 = vadd.f32 %v370, %v1792
        %v1794 = vpop.f32.mrb[0].mxu0
        %1795 = vdwg.mxu0
        %v1796 = vtanh.pop %v1793
        %1798 = vset.pattern.permute.xlu0 0
        %1799 = vperm.xlu0 %1798, %v1722
        %v1800 = vpop.permute.xlu0 %1799
        %v1802 = vmul.f32 %v1796, %v1800
        %v1803 = vadd.f32 %v1706, %v1802
        %1805 = vrot.lane.b32.xlu0 %v1720, 32
        %v1806 = vpop.permute.xlu0 %1805
        %v1808 = vsel %vm372, %v1715, %v1806
        %v1810 = vsel %vm465, %v1808, 0
        %1812 = vmatprep.subr.mxu0 0.0
        %1813 = vmatpush1.msra.mxu0 %v348
        %1814 = vmatprep.subr.mxu0 0.0
        %1815 = vmatpush1.msra.mxu0 %v349
        %1816 = vmatprep.subr.mxu0 0.0
        %1817 = vmatpush1.msra.mxu0 %v350
        %1818 = vmatprep.subr.mxu0 0.0
        %1819 = vmatpush1.msra.mxu0 %v351
        %1820 = vmatprep.subr.mxu0 0.0
        %1821 = vmatpush1.msra.mxu0 %v352
        %1822 = vmatprep.subr.mxu0 0.0
        %1823 = vmatpush1.msra.mxu0 %v353
        %1824 = vmatprep.subr.mxu0 0.0
        %1825 = vmatpush1.msra.mxu0 %v354
        %1826 = vmatprep.subr.mxu0 0.0
        %1827 = vmatpush1.msra.mxu0 %v355
        %1828 = vmatprep.subr.mxu0 0.0
        %1829 = vmatpush1.msra.mxu0 0.0
        %1830 = vmatprep.subr.mxu0 0.0
        %1831 = vmatpush1.msra.mxu0 0.0
        %1832 = vmatprep.subr.mxu0 0.0
        %1833 = vmatpush1.msra.mxu0 0.0
        %1834 = vmatprep.subr.mxu0 0.0
        %1835 = vmatpush1.msra.mxu0 0.0
        %1836 = vmatprep.subr.mxu0 0.0
        %1837 = vmatpush1.msra.mxu0 0.0
        %1838 = vmatprep.subr.mxu0 0.0
        %1839 = vmatpush1.msra.mxu0 0.0
        %1840 = vmatprep.subr.mxu0 0.0
        %1841 = vmatpush1.msra.mxu0 0.0
        %1842 = vmatprep.subr.mxu0 0.0
        %1843 = vmatpush1.msra.mxu0 0.0
        %1844 = vmatprep.subr.mxu0 0.0
        %1845 = vmatpush1.msra.mxu0 0.0
        %1846 = vmatprep.subr.mxu0 0.0
        %1847 = vmatpush1.msra.mxu0 0.0
        %1848 = vmatprep.subr.mxu0 0.0
        %1849 = vmatpush1.msra.mxu0 0.0
        %1850 = vmatprep.subr.mxu0 0.0
        %1851 = vmatpush1.msra.mxu0 0.0
        %1852 = vmatprep.subr.mxu0 0.0
        %1853 = vmatpush1.msra.mxu0 0.0
        %1854 = vmatprep.subr.mxu0 0.0
        %1855 = vmatpush1.msra.mxu0 0.0
        %1856 = vmatprep.subr.mxu0 0.0
        %1857 = vmatpush1.msra.mxu0 0.0
        %1858 = vmatprep.subr.mxu0 0.0
        %1859 = vmatpush1.msra.mxu0 0.0
        %1860 = vmatprep.subr.mxu0 0.0
        %1861 = vmatpush1.msra.mxu0 0.0
        %1862 = vmatprep.subr.mxu0 0.0
        %1863 = vmatpush1.msra.mxu0 0.0
        %1864 = vmatprep.subr.mxu0 0.0
        %1865 = vmatpush1.msra.mxu0 0.0
        %1866 = vmatprep.subr.mxu0 0.0
        %1867 = vmatpush1.msra.mxu0 0.0
        %1868 = vmatprep.subr.mxu0 0.0
        %1869 = vmatpush1.msra.mxu0 0.0
        %1870 = vmatprep.subr.mxu0 0.0
        %1871 = vmatpush1.msra.mxu0 0.0
        %1872 = vmatprep.subr.mxu0 0.0
        %1873 = vmatpush1.msra.mxu0 0.0
        %1874 = vmatprep.subr.mxu0 0.0
        %1875 = vmatpush1.msra.mxu0 0.0
        %1876 = vmatprep.mubr.f32.mxu0 0.0
        %1877 = vmatmul.mubr.f32.gmra.mrb[0].mxu0 %v1810
        %v1878 = vpop.f32.mrb[0].mxu0
        %v1879 = vadd.f32 %v463, %v1878
        %v1880 = vpop.f32.mrb[0].mxu0
        %1881 = vdwg.mxu0
        %v1882 = vxor.u32 %v1879, 2147483648
        %v1883 = vmul.f32 %v1882, 1.442695
        %v1884 = vpow.pop %v1883
        %v1885 = vadd.f32 %v1884, 1.0
        %v1886 = vrcp.pop %v1885
        %v1887 = vmul.f32 1.0, %v1886
        %v1888 = vmul.f32 %v1887, %v1803
        %1890 = vrot.lane.b32.xlu0 %v1887, 64
        %v1891 = vpop.permute.xlu0 %1890
        %v1893 = vmul.f32 %v1887, %v1891
        %1895 = vrot.lane.b32.xlu0 %v1893, 96
        %v1896 = vpop.permute.xlu0 %1895
        %v1898 = vadd.f32 %v1888, %v1896
        %v1899 = vtanh.pop %v1898
        %1901 = vrot.lane.b32.xlu0 %v1899, 64
        %v1902 = vpop.permute.xlu0 %1901
        %v1904 = vmul.f32 %v1887, %v1902
        %1906 = vrot.lane.b32.xlu0 %v1904, 64
        %v1907 = vpop.permute.xlu0 %1906
        %s1909 = scalar_lea.vmem %s321, 56 [#allocation9]
        %1910 = vst.msk [vmem:[%s1909] sm:$0xff] %vm372, %v1907
        %1911 = vst.msk [vmem:[#allocation2] sm:$0xff] %vm372, %v1907
        %1912 = vst.msk [vmem:[#allocation3] sm:$0xff] %vm372, %v1898
        %s1913 = sand.u32 %s184, 1
        %s1914 = scalar_lea.sflag [#allocation6], %s1913
        %s1915 = sand.u32 %s184, 1
        %s1916 = smul.addr %s1915, 64
        %s1917 = scalar_lea.vmem [#allocation9], %s1916
        // Predicated region
        $region57: #{tpu_custom_call.1} parent=43 // pred_check
          %p1918 = pneg %p194
        $region58: #{tpu_custom_call.1} parent=43 // pred_check_branch
          %1920 = sbr.rel (%p1918) target = $region60
        $region59: #{tpu_custom_call.1} parent=43 // pred_region
          %s1921 = smul.u32 8, %s27
          %s1923 = ssub.s32 1024, 1024
          %1924 = vsyncadd %s1914, %s1923
          %s1925 = sadd.s32 %s26, %s1921
          %s1926 = smul.addr %s1925, 128
          %s1927 = scalar_lea.hbm %s6, %s1926
          %s1928 = sshll.u32 %s1917, 4
          %s1929 = int_to_ptr.vmem [resolvable:$true] %s1928
          %1934 = dma.vmem_to_hbm [thread:$0]  %s1929, 1024, %s1927, %s1914, 128, 128, 8
        $region60: #{tpu_custom_call.1} parent=43 // pred_fallthru
          _
      $region44: #{tpu_custom_call.1} parent=5 // pred_fallthru
        _
      %p1935 = scmp.le.s32.totalorder 2, %s17
      // Predicated region
      $region61: #{tpu_custom_call.1} parent=5 // pred_check
        %p1936 = pneg %p1935
      $region62: #{tpu_custom_call.1} parent=5 // pred_check_branch
        %1938 = sbr.rel (%p1936) target = $region64
      $region63: #{tpu_custom_call.1} parent=5 // pred_region
        %s1939 = ssub.s32 %s17, 2
        // Predicated region
        $region65: #{tpu_custom_call.1} parent=63 // pred_check
          %p1940 = pneg %p200
        $region66: #{tpu_custom_call.1} parent=63 // pred_check_branch
          %1942 = sbr.rel (%p1940) target = $region68
        $region67: #{tpu_custom_call.1} parent=63 // pred_region
          %s1943 = sand.u32 %s185, 1
          %s1944 = scalar_lea.sflag [#allocation6], %s1943
          %s1945 = sand.u32 %s185, 1
          %s1946 = smul.addr %s1945, 64
          %s1947 = scalar_lea.vmem [#allocation9], %s1946
          %1948 = dma.done %s1944, 1024
        $region68: #{tpu_custom_call.1} parent=63 // pred_fallthru
          _
      $region64: #{tpu_custom_call.1} parent=5 // pred_fallthru
        _
    $region6: #{tpu_custom_call.1} parent=1 // loop_footer
      %s21 = sadd.s32 1, %s17
    $region7: #{tpu_custom_call.1} parent=1 // loop_footer_branch
      %16 = sbr.rel target = $region3
    $region8: #{tpu_custom_call.1} parent=1 // loop_exit
      _
    %1949 = vsyncpa [#allocation5], 1
    %s1950 = scalar_lea.sflag [#allocation5], 1
    %1951 = vsyncpa %s1950, 1
    %1952 = vsyncpa [#allocation8], 1
    %1953 = vsyncpa [#allocation6], 1
    %s1954 = scalar_lea.sflag [#allocation6], 1
    %1955 = vsyncpa %s1954, 1

</llo_original>
